<compile_context>
chip_gen: v6e
topology: v6e:2x2x1
jax: 0.10.0
libtpu: 0.0.40
codegen_flags: <defaults>
</compile_context>

<pallas_src>
import jax
import jax.numpy as jnp
from jax import lax
from jax.experimental import pallas as pl
from jax.experimental.pallas import tpu as pltpu


def _make_dense_layer_kernel(H, W):
    def kernel(x_ref, mask_ref, s1_ref, b1_ref, w1_ref, b2_ref, w2_ref,
               o_ref, patch_ref):
        # x_ref    : (C_in, L)        L = B*H*W; channels on sublanes
        # mask_ref : (9, 1, L)        precomputed {0,1} 3x3 edge-validity masks
        # s1/b1    : (C_in, 1)        folded eval-mode BatchNorm1 scale / bias
        # w1_ref   : (C_mid, C_in)    1x1 conv weight with BN2 scale pre-folded
        # b2_ref   : (C_mid, 1)       folded BatchNorm2 bias
        # w2_ref   : (C_out, 9*C_mid) 3x3 conv weight, im2col-packed
        # o_ref    : (C_out, L)
        # patch_ref: (9*C_mid, L)     VMEM scratch for the im2col patch matrix
        C_in = x_ref.shape[0]
        C_mid = w1_ref.shape[0]
        L = x_ref.shape[1]

        # ---- BatchNorm1 (folded scale/bias) + ReLU -----------------------
        xr = jnp.maximum(x_ref[...] * s1_ref[...] + b1_ref[...], 0.0)

        # ---- 1x1 conv (BN2 scale folded in) as C_in VPU broadcast-FMAs ---
        # K = C_in = 4 would waste a full MXU pass; keep the MXU for the 3x3.
        y = w1_ref[:, 0:1] * xr[0:1, :]
        for c in range(1, C_in):
            y = y + w1_ref[:, c:c + 1] * xr[c:c + 1, :]
        yr = jnp.maximum(y + b2_ref[...], 0.0)               # (C_mid, L)

        # ---- 3x3 conv, padding=1: im2col via 9 rolls + one mask-mul ------
        # Write each masked tap straight into its final rows of the scratch
        # (C_mid = 32 rows per tap -> sublane-aligned static offsets).
        tap = 0
        for dy in (-1, 0, 1):
            for dx in (-1, 0, 1):
                shift = dy * W + dx
                if shift == 0:                                # center tap
                    shifted = yr
                else:
                    # out[p] = yr[p + shift]  (jnp.roll semantics: k = -shift)
                    shifted = pltpu.roll(yr, (-shift) % L, 1)
                    shifted = shifted * mask_ref[tap]         # (1, L) bcast
                patch_ref[tap * C_mid:(tap + 1) * C_mid, :] = shifted
                tap += 1

        out = jnp.dot(w2_ref[...], patch_ref[...],
                      preferred_element_type=jnp.float32)     # (C_out, L)
        o_ref[...] = out.astype(o_ref.dtype)

    return kernel


def _make_tap_mask(H, W, batch_block):
    """{0,1} validity mask per 3x3 tap, periodic per image along the lanes."""
    HW = H * W
    row = jnp.arange(HW, dtype=jnp.int32) // W
    col = jnp.arange(HW, dtype=jnp.int32) % W
    masks = []
    for dy in (-1, 0, 1):
        for dx in (-1, 0, 1):
            ok = ((row + dy >= 0) & (row + dy < H) &
                  (col + dx >= 0) & (col + dx < W))
            masks.append(ok.astype(jnp.float32))
    m = jnp.stack(masks, axis=0)                  # (9, HW)
    m = jnp.tile(m, (1, batch_block))             # (9, batch_block*HW)
    return m.reshape(9, 1, batch_block * HW)


def _pick_batch_block(N, max_block=16):
    """Largest divisor of N that is <= max_block (VMEM: ~0.4 MB/image)."""
    for b in range(min(N, max_block), 0, -1):
        if N % b == 0:
            return b
    return 1


def dense_layer_forward(x_nchw, s1, b1, w1s, b2, w2r, batch_block=None):
    """x_nchw: (N, C_in, H, W) float32. Returns (N, growth_rate, H, W)."""
    N, C_in, H, W = x_nchw.shape
    C_mid = w1s.shape[0]
    C_out = w2r.shape[0]
    HW = H * W

    if batch_block is None:
        batch_block = _pick_batch_block(N)
    assert N % batch_block == 0, (N, batch_block)
    L = batch_block * HW                 # lanes per grid step
    grid = (N // batch_block,)

    # Channels on sublanes, flattened (image, pixel) on lanes.  These are tiny
    # trace-time XLA transposes (a few KB), not kernel work.
    x_cl = jnp.transpose(x_nchw.reshape(N, C_in, HW), (1, 0, 2)) \
              .reshape(C_in, N * HW)
    mask = _make_tap_mask(H, W, batch_block)           # (9, 1, L)

    out_flat = pl.pallas_call(
        _make_dense_layer_kernel(H, W),
        out_shape=jax.ShapeDtypeStruct((C_out, N * HW), x_nchw.dtype),
        grid_spec=pltpu.PrefetchScalarGridSpec(
            num_scalar_prefetch=0,
            grid=grid,
            in_specs=[
                pl.BlockSpec((C_in, L), lambda i: (0, i)),          # x
                pl.BlockSpec((9, 1, L), lambda i: (0, 0, 0)),       # tap masks
                pl.BlockSpec((C_in, 1), lambda i: (0, 0)),          # s1
                pl.BlockSpec((C_in, 1), lambda i: (0, 0)),          # b1
                pl.BlockSpec((C_mid, C_in), lambda i: (0, 0)),      # w1 (scaled)
                pl.BlockSpec((C_mid, 1), lambda i: (0, 0)),         # b2
                pl.BlockSpec((C_out, 9 * C_mid), lambda i: (0, 0)), # w2 (im2col)
            ],
            out_specs=pl.BlockSpec((C_out, L), lambda i: (0, i)),
            scratch_shapes=[pltpu.VMEM((9 * C_mid, L), jnp.float32)],
        ),
        compiler_params=pltpu.CompilerParams(
            dimension_semantics=("parallel",)),
    )(x_cl, mask, s1, b1, w1s, b2, w2r)

    return jnp.transpose(out_flat.reshape(C_out, N, HW), (1, 0, 2)) \
              .reshape(N, C_out, H, W)


if __name__ == "__main__":
    # Module config: _DenseLayer(num_input_features=4, growth_rate=8,
    #                            bn_size=4, drop_rate=0.0, efficient=False)
    num_input_features = 4
    growth_rate = 8
    bn_size = 4
    drop_rate = 0.0  # dropout branch disabled, matching the module config
    eps = 1e-5

    C_in = num_input_features
    C_mid = bn_size * growth_rate   # 32
    C_out = growth_rate             # 8
    N, H, W = 2, 16, 16

    key = jax.random.PRNGKey(0)
    ks = jax.random.split(key, 11)

    x = jax.random.normal(ks[0], (N, C_in, H, W), jnp.float32)

    # BatchNorm2d(C_in) parameters (eval-mode running statistics)
    gamma1 = 1.0 + 0.1 * jax.random.normal(ks[1], (C_in,), jnp.float32)
    beta1 = 0.1 * jax.random.normal(ks[2], (C_in,), jnp.float32)
    mean1 = 0.1 * jax.random.normal(ks[3], (C_in,), jnp.float32)
    var1 = jax.random.uniform(ks[4], (C_in,), jnp.float32, 0.5, 1.5)
    # Conv2d(C_in, C_mid, 1, bias=False): weight (C_mid, C_in, 1, 1)
    w1_pt = 0.2 * jax.random.normal(ks[5], (C_mid, C_in, 1, 1), jnp.float32)

    # BatchNorm2d(C_mid)
    gamma2 = 1.0 + 0.1 * jax.random.normal(ks[6], (C_mid,), jnp.float32)
    beta2 = 0.1 * jax.random.normal(ks[7], (C_mid,), jnp.float32)
    mean2 = 0.1 * jax.random.normal(ks[8], (C_mid,), jnp.float32)
    var2 = jax.random.uniform(ks[9], (C_mid,), jnp.float32, 0.5, 1.5)
    # Conv2d(C_mid, C_out, 3, padding=1, bias=False): (C_out, C_mid, 3, 3)
    w2_pt = 0.1 * jax.random.normal(ks[10], (C_out, C_mid, 3, 3), jnp.float32)

    # Fold eval-mode BatchNorm into per-channel scale/bias (column vectors for
    # the channels-on-sublanes kernel layout).
    inv1 = 1.0 / jnp.sqrt(var1 + eps)
    s1 = (gamma1 * inv1).reshape(C_in, 1)
    b1 = (beta1 - mean1 * gamma1 * inv1).reshape(C_in, 1)

    inv2 = 1.0 / jnp.sqrt(var2 + eps)
    s2v = gamma2 * inv2
    b2 = (beta2 - mean2 * s2v).reshape(C_mid, 1)

    # Repack conv weights:
    #   w1s: (C_mid, C_in) with the BN2 scale folded into its rows.
    #   w2r: (C_out, 9*C_mid) im2col layout; column = (ky*3+kx)*C_mid + c.
    w1s = w1_pt[:, :, 0, 0] * s2v[:, None]
    w2r = jnp.transpose(w2_pt, (0, 2, 3, 1)).reshape(C_out, 9 * C_mid)

    out = dense_layer_forward(x, s1, b1, w1s, b2, w2r)
    out = jax.block_until_ready(out)

    # Pure-JAX NCHW reference reproducing the PyTorch eval-mode forward.
    def reference(x):
        h = (x - mean1[None, :, None, None]) / jnp.sqrt(var1 + eps)[None, :, None, None]
        h = h * gamma1[None, :, None, None] + beta1[None, :, None, None]
        h = jnp.maximum(h, 0.0)
        h = lax.conv_general_dilated(h, w1_pt, (1, 1), "VALID",
                                     dimension_numbers=("NCHW", "OIHW", "NCHW"))
        h = (h - mean2[None, :, None, None]) / jnp.sqrt(var2 + eps)[None, :, None, None]
        h = h * gamma2[None, :, None, None] + beta2[None, :, None, None]
        h = jnp.maximum(h, 0.0)
        h = lax.conv_general_dilated(h, w2_pt, (1, 1), ((1, 1), (1, 1)),
                                     dimension_numbers=("NCHW", "OIHW", "NCHW"))
        return h

    expected = jax.block_until_ready(reference(x))
    assert out.shape == (N, C_out, H, W), out.shape
    assert jnp.allclose(out, expected, atol=1e-4, rtol=1e-4), (
        float(jnp.max(jnp.abs(out - expected))))
    print("KERNEL_OK")
</pallas_src>

<mosaic_0001>
module attributes {stable_mosaic.version = 11 : i64} {
  func.func @kernel(%arg0: i32, %arg1: memref<4x512xf32, #tpu.memory_space<vmem>>, %arg2: memref<9x1x512xf32, #tpu.memory_space<vmem>>, %arg3: memref<4x1xf32, #tpu.memory_space<vmem>>, %arg4: memref<4x1xf32, #tpu.memory_space<vmem>>, %arg5: memref<32x4xf32, #tpu.memory_space<vmem>>, %arg6: memref<32x1xf32, #tpu.memory_space<vmem>>, %arg7: memref<8x288xf32, #tpu.memory_space<vmem>>, %arg8: memref<8x512xf32, #tpu.memory_space<vmem>>, %arg9: memref<288x512xf32, #tpu.memory_space<vmem>>) attributes {dimension_semantics = [#tpu.dimension_semantics<parallel>], iteration_bounds = array<i64: 1>, scalar_prefetch = 0 : i64, scratch_operands = 1 : i64, tpu.core_type = #tpu.core_type<tc>, window_params = [{transform_indices = @transform_0, window_bounds = array<i64: 4, 512>}, {pipeline_mode = #tpu.pipeline_mode<synchronous>, transform_indices = @transform_1, window_bounds = array<i64: 9, 1, 512>}, {pipeline_mode = #tpu.pipeline_mode<synchronous>, transform_indices = @transform_2, window_bounds = array<i64: 4, 1>}, {pipeline_mode = #tpu.pipeline_mode<synchronous>, transform_indices = @transform_3, window_bounds = array<i64: 4, 1>}, {pipeline_mode = #tpu.pipeline_mode<synchronous>, transform_indices = @transform_4, window_bounds = array<i64: 32, 4>}, {pipeline_mode = #tpu.pipeline_mode<synchronous>, transform_indices = @transform_5, window_bounds = array<i64: 32, 1>}, {pipeline_mode = #tpu.pipeline_mode<synchronous>, transform_indices = @transform_6, window_bounds = array<i64: 8, 288>}, {transform_indices = @transform_7, window_bounds = array<i64: 8, 512>}]} {
    %c0 = arith.constant 0 : index
    %c0_0 = arith.constant 0 : index
    %0 = vector.load %arg1[%c0, %c0_0] : memref<4x512xf32, #tpu.memory_space<vmem>>, vector<4x512xf32>
    %c0_1 = arith.constant 0 : index
    %c0_2 = arith.constant 0 : index
    %1 = vector.load %arg3[%c0_1, %c0_2] : memref<4x1xf32, #tpu.memory_space<vmem>>, vector<4x1xf32>
    %2 = vector.broadcast %1 : vector<4x1xf32> to vector<4x512xf32>
    %3 = arith.mulf %0, %2 : vector<4x512xf32>
    %c0_3 = arith.constant 0 : index
    %c0_4 = arith.constant 0 : index
    %4 = vector.load %arg4[%c0_3, %c0_4] : memref<4x1xf32, #tpu.memory_space<vmem>>, vector<4x1xf32>
    %5 = vector.broadcast %4 : vector<4x1xf32> to vector<4x512xf32>
    %6 = arith.addf %3, %5 : vector<4x512xf32>
    %cst = arith.constant 0.000000e+00 : f32
    %7 = vector.broadcast %cst : f32 to vector<4x512xf32>
    %8 = arith.maximumf %6, %7 : vector<4x512xf32>
    %c0_5 = arith.constant 0 : index
    %c0_6 = arith.constant 0 : index
    %9 = vector.load %arg5[%c0_5, %c0_6] : memref<32x4xf32, #tpu.memory_space<vmem>>, vector<32x1xf32>
    %10 = vector.extract_strided_slice %8 {offsets = [0, 0], sizes = [1, 512], strides = [1, 1]} : vector<4x512xf32> to vector<1x512xf32>
    %11 = vector.broadcast %9 : vector<32x1xf32> to vector<32x512xf32>
    %12 = vector.broadcast %10 : vector<1x512xf32> to vector<32x512xf32>
    %13 = arith.mulf %11, %12 : vector<32x512xf32>
    %c0_7 = arith.constant 0 : index
    %c1 = arith.constant 1 : index
    %14 = vector.load %arg5[%c0_7, %c1] : memref<32x4xf32, #tpu.memory_space<vmem>>, vector<32x1xf32>
    %15 = vector.extract_strided_slice %8 {offsets = [1, 0], sizes = [1, 512], strides = [1, 1]} : vector<4x512xf32> to vector<1x512xf32>
    %16 = vector.broadcast %14 : vector<32x1xf32> to vector<32x512xf32>
    %17 = vector.broadcast %15 : vector<1x512xf32> to vector<32x512xf32>
    %18 = arith.mulf %16, %17 : vector<32x512xf32>
    %19 = arith.addf %13, %18 : vector<32x512xf32>
    %c0_8 = arith.constant 0 : index
    %c2 = arith.constant 2 : index
    %20 = vector.load %arg5[%c0_8, %c2] : memref<32x4xf32, #tpu.memory_space<vmem>>, vector<32x1xf32>
    %21 = vector.extract_strided_slice %8 {offsets = [2, 0], sizes = [1, 512], strides = [1, 1]} : vector<4x512xf32> to vector<1x512xf32>
    %22 = vector.broadcast %20 : vector<32x1xf32> to vector<32x512xf32>
    %23 = vector.broadcast %21 : vector<1x512xf32> to vector<32x512xf32>
    %24 = arith.mulf %22, %23 : vector<32x512xf32>
    %25 = arith.addf %19, %24 : vector<32x512xf32>
    %c0_9 = arith.constant 0 : index
    %c3 = arith.constant 3 : index
    %26 = vector.load %arg5[%c0_9, %c3] : memref<32x4xf32, #tpu.memory_space<vmem>>, vector<32x1xf32>
    %27 = vector.extract_strided_slice %8 {offsets = [3, 0], sizes = [1, 512], strides = [1, 1]} : vector<4x512xf32> to vector<1x512xf32>
    %28 = vector.broadcast %26 : vector<32x1xf32> to vector<32x512xf32>
    %29 = vector.broadcast %27 : vector<1x512xf32> to vector<32x512xf32>
    %30 = arith.mulf %28, %29 : vector<32x512xf32>
    %31 = arith.addf %25, %30 : vector<32x512xf32>
    %c0_10 = arith.constant 0 : index
    %c0_11 = arith.constant 0 : index
    %32 = vector.load %arg6[%c0_10, %c0_11] : memref<32x1xf32, #tpu.memory_space<vmem>>, vector<32x1xf32>
    %33 = vector.broadcast %32 : vector<32x1xf32> to vector<32x512xf32>
    %34 = arith.addf %31, %33 : vector<32x512xf32>
    %cst_12 = arith.constant 0.000000e+00 : f32
    %35 = vector.broadcast %cst_12 : f32 to vector<32x512xf32>
    %36 = arith.maximumf %34, %35 : vector<32x512xf32>
    %c17_i32 = arith.constant 17 : i32
    %37 = tpu.dynamic_rotate %36 by %c17_i32 dim 1 : vector<32x512xf32>, i32 -> vector<32x512xf32>
    %c0_13 = arith.constant 0 : index
    %c0_14 = arith.constant 0 : index
    %c0_15 = arith.constant 0 : index
    %38 = vector.load %arg2[%c0_13, %c0_14, %c0_15] : memref<9x1x512xf32, #tpu.memory_space<vmem>>, vector<1x1x512xf32>
    %39 = vector.shape_cast %38 : vector<1x1x512xf32> to vector<1x512xf32>
    %40 = vector.broadcast %39 : vector<1x512xf32> to vector<32x512xf32>
    %41 = arith.mulf %37, %40 : vector<32x512xf32>
    %c0_16 = arith.constant 0 : index
    %c0_17 = arith.constant 0 : index
    %42 = vector.load %arg9[%c0_16, %c0_17] : memref<288x512xf32, #tpu.memory_space<vmem>>, vector<32x512xf32>
    tpu.vector_store %arg9[%c0_16, %c0_17], %41 {strides = array<i32>} : memref<288x512xf32, #tpu.memory_space<vmem>>, vector<32x512xf32>,
    %c16_i32 = arith.constant 16 : i32
    %43 = tpu.dynamic_rotate %36 by %c16_i32 dim 1 : vector<32x512xf32>, i32 -> vector<32x512xf32>
    %c1_18 = arith.constant 1 : index
    %c0_19 = arith.constant 0 : index
    %c0_20 = arith.constant 0 : index
    %44 = vector.load %arg2[%c1_18, %c0_19, %c0_20] : memref<9x1x512xf32, #tpu.memory_space<vmem>>, vector<1x1x512xf32>
    %45 = vector.shape_cast %44 : vector<1x1x512xf32> to vector<1x512xf32>
    %46 = vector.broadcast %45 : vector<1x512xf32> to vector<32x512xf32>
    %47 = arith.mulf %43, %46 : vector<32x512xf32>
    %c32 = arith.constant 32 : index
    %c0_21 = arith.constant 0 : index
    %48 = vector.load %arg9[%c32, %c0_21] : memref<288x512xf32, #tpu.memory_space<vmem>>, vector<32x512xf32>
    tpu.vector_store %arg9[%c32, %c0_21], %47 {strides = array<i32>} : memref<288x512xf32, #tpu.memory_space<vmem>>, vector<32x512xf32>,
    %c15_i32 = arith.constant 15 : i32
    %49 = tpu.dynamic_rotate %36 by %c15_i32 dim 1 : vector<32x512xf32>, i32 -> vector<32x512xf32>
    %c2_22 = arith.constant 2 : index
    %c0_23 = arith.constant 0 : index
    %c0_24 = arith.constant 0 : index
    %50 = vector.load %arg2[%c2_22, %c0_23, %c0_24] : memref<9x1x512xf32, #tpu.memory_space<vmem>>, vector<1x1x512xf32>
    %51 = vector.shape_cast %50 : vector<1x1x512xf32> to vector<1x512xf32>
    %52 = vector.broadcast %51 : vector<1x512xf32> to vector<32x512xf32>
    %53 = arith.mulf %49, %52 : vector<32x512xf32>
    %c64 = arith.constant 64 : index
    %c0_25 = arith.constant 0 : index
    %54 = vector.load %arg9[%c64, %c0_25] : memref<288x512xf32, #tpu.memory_space<vmem>>, vector<32x512xf32>
    tpu.vector_store %arg9[%c64, %c0_25], %53 {strides = array<i32>} : memref<288x512xf32, #tpu.memory_space<vmem>>, vector<32x512xf32>,
    %c1_i32 = arith.constant 1 : i32
    %55 = tpu.dynamic_rotate %36 by %c1_i32 dim 1 : vector<32x512xf32>, i32 -> vector<32x512xf32>
    %c3_26 = arith.constant 3 : index
    %c0_27 = arith.constant 0 : index
    %c0_28 = arith.constant 0 : index
    %56 = vector.load %arg2[%c3_26, %c0_27, %c0_28] : memref<9x1x512xf32, #tpu.memory_space<vmem>>, vector<1x1x512xf32>
    %57 = vector.shape_cast %56 : vector<1x1x512xf32> to vector<1x512xf32>
    %58 = vector.broadcast %57 : vector<1x512xf32> to vector<32x512xf32>
    %59 = arith.mulf %55, %58 : vector<32x512xf32>
    %c96 = arith.constant 96 : index
    %c0_29 = arith.constant 0 : index
    %60 = vector.load %arg9[%c96, %c0_29] : memref<288x512xf32, #tpu.memory_space<vmem>>, vector<32x512xf32>
    tpu.vector_store %arg9[%c96, %c0_29], %59 {strides = array<i32>} : memref<288x512xf32, #tpu.memory_space<vmem>>, vector<32x512xf32>,
    %c128 = arith.constant 128 : index
    %c0_30 = arith.constant 0 : index
    %61 = vector.load %arg9[%c128, %c0_30] : memref<288x512xf32, #tpu.memory_space<vmem>>, vector<32x512xf32>
    tpu.vector_store %arg9[%c128, %c0_30], %36 {strides = array<i32>} : memref<288x512xf32, #tpu.memory_space<vmem>>, vector<32x512xf32>,
    %c511_i32 = arith.constant 511 : i32
    %62 = tpu.dynamic_rotate %36 by %c511_i32 dim 1 : vector<32x512xf32>, i32 -> vector<32x512xf32>
    %c5 = arith.constant 5 : index
    %c0_31 = arith.constant 0 : index
    %c0_32 = arith.constant 0 : index
    %63 = vector.load %arg2[%c5, %c0_31, %c0_32] : memref<9x1x512xf32, #tpu.memory_space<vmem>>, vector<1x1x512xf32>
    %64 = vector.shape_cast %63 : vector<1x1x512xf32> to vector<1x512xf32>
    %65 = vector.broadcast %64 : vector<1x512xf32> to vector<32x512xf32>
    %66 = arith.mulf %62, %65 : vector<32x512xf32>
    %c160 = arith.constant 160 : index
    %c0_33 = arith.constant 0 : index
    %67 = vector.load %arg9[%c160, %c0_33] : memref<288x512xf32, #tpu.memory_space<vmem>>, vector<32x512xf32>
    tpu.vector_store %arg9[%c160, %c0_33], %66 {strides = array<i32>} : memref<288x512xf32, #tpu.memory_space<vmem>>, vector<32x512xf32>,
    %c497_i32 = arith.constant 497 : i32
    %68 = tpu.dynamic_rotate %36 by %c497_i32 dim 1 : vector<32x512xf32>, i32 -> vector<32x512xf32>
    %c6 = arith.constant 6 : index
    %c0_34 = arith.constant 0 : index
    %c0_35 = arith.constant 0 : index
    %69 = vector.load %arg2[%c6, %c0_34, %c0_35] : memref<9x1x512xf32, #tpu.memory_space<vmem>>, vector<1x1x512xf32>
    %70 = vector.shape_cast %69 : vector<1x1x512xf32> to vector<1x512xf32>
    %71 = vector.broadcast %70 : vector<1x512xf32> to vector<32x512xf32>
    %72 = arith.mulf %68, %71 : vector<32x512xf32>
    %c192 = arith.constant 192 : index
    %c0_36 = arith.constant 0 : index
    %73 = vector.load %arg9[%c192, %c0_36] : memref<288x512xf32, #tpu.memory_space<vmem>>, vector<32x512xf32>
    tpu.vector_store %arg9[%c192, %c0_36], %72 {strides = array<i32>} : memref<288x512xf32, #tpu.memory_space<vmem>>, vector<32x512xf32>,
    %c496_i32 = arith.constant 496 : i32
    %74 = tpu.dynamic_rotate %36 by %c496_i32 dim 1 : vector<32x512xf32>, i32 -> vector<32x512xf32>
    %c7 = arith.constant 7 : index
    %c0_37 = arith.constant 0 : index
    %c0_38 = arith.constant 0 : index
    %75 = vector.load %arg2[%c7, %c0_37, %c0_38] : memref<9x1x512xf32, #tpu.memory_space<vmem>>, vector<1x1x512xf32>
    %76 = vector.shape_cast %75 : vector<1x1x512xf32> to vector<1x512xf32>
    %77 = vector.broadcast %76 : vector<1x512xf32> to vector<32x512xf32>
    %78 = arith.mulf %74, %77 : vector<32x512xf32>
    %c224 = arith.constant 224 : index
    %c0_39 = arith.constant 0 : index
    %79 = vector.load %arg9[%c224, %c0_39] : memref<288x512xf32, #tpu.memory_space<vmem>>, vector<32x512xf32>
    tpu.vector_store %arg9[%c224, %c0_39], %78 {strides = array<i32>} : memref<288x512xf32, #tpu.memory_space<vmem>>, vector<32x512xf32>,
    %c495_i32 = arith.constant 495 : i32
    %80 = tpu.dynamic_rotate %36 by %c495_i32 dim 1 : vector<32x512xf32>, i32 -> vector<32x512xf32>
    %c8 = arith.constant 8 : index
    %c0_40 = arith.constant 0 : index
    %c0_41 = arith.constant 0 : index
    %81 = vector.load %arg2[%c8, %c0_40, %c0_41] : memref<9x1x512xf32, #tpu.memory_space<vmem>>, vector<1x1x512xf32>
    %82 = vector.shape_cast %81 : vector<1x1x512xf32> to vector<1x512xf32>
    %83 = vector.broadcast %82 : vector<1x512xf32> to vector<32x512xf32>
    %84 = arith.mulf %80, %83 : vector<32x512xf32>
    %c256 = arith.constant 256 : index
    %c0_42 = arith.constant 0 : index
    %85 = vector.load %arg9[%c256, %c0_42] : memref<288x512xf32, #tpu.memory_space<vmem>>, vector<32x512xf32>
    tpu.vector_store %arg9[%c256, %c0_42], %84 {strides = array<i32>} : memref<288x512xf32, #tpu.memory_space<vmem>>, vector<32x512xf32>,
    %c0_43 = arith.constant 0 : index
    %c0_44 = arith.constant 0 : index
    %86 = vector.load %arg7[%c0_43, %c0_44] : memref<8x288xf32, #tpu.memory_space<vmem>>, vector<8x288xf32>
    %c0_45 = arith.constant 0 : index
    %c0_46 = arith.constant 0 : index
    %87 = vector.load %arg9[%c0_45, %c0_46] : memref<288x512xf32, #tpu.memory_space<vmem>>, vector<288x512xf32>
    %cst_47 = arith.constant dense<0.000000e+00> : vector<8x512xf32>
    %88 = tpu.matmul %86, %87, %cst_47 {dimension_numbers = #tpu.dot_dimension_numbers<[1], [0], [0], [1], [0, 0, 1, 1], [], []>} : vector<8x288xf32>, vector<288x512xf32>, vector<8x512xf32> -> vector<8x512xf32>
    %c0_48 = arith.constant 0 : index
    %c0_49 = arith.constant 0 : index
    %89 = vector.load %arg8[%c0_48, %c0_49] : memref<8x512xf32, #tpu.memory_space<vmem>>, vector<8x512xf32>
    tpu.vector_store %arg8[%c0_48, %c0_49], %88 {strides = array<i32>} : memref<8x512xf32, #tpu.memory_space<vmem>>, vector<8x512xf32>,
    return
  }
  func.func @transform_0(%arg0: i32) -> (i32, i32) {
    %c0_i32 = arith.constant 0 : i32
    %c0_i32_0 = arith.constant 0 : i32
    return %c0_i32, %arg0 : i32, i32
  }
  func.func @transform_1(%arg0: i32) -> (i32, i32, i32) {
    %c0_i32 = arith.constant 0 : i32
    %c0_i32_0 = arith.constant 0 : i32
    %c0_i32_1 = arith.constant 0 : i32
    %c0_i32_2 = arith.constant 0 : i32
    return %c0_i32, %c0_i32_0, %c0_i32_1 : i32, i32, i32
  }
  func.func @transform_2(%arg0: i32) -> (i32, i32) {
    %c0_i32 = arith.constant 0 : i32
    %c0_i32_0 = arith.constant 0 : i32
    %c0_i32_1 = arith.constant 0 : i32
    return %c0_i32, %c0_i32_0 : i32, i32
  }
  func.func @transform_3(%arg0: i32) -> (i32, i32) {
    %c0_i32 = arith.constant 0 : i32
    %c0_i32_0 = arith.constant 0 : i32
    %c0_i32_1 = arith.constant 0 : i32
    return %c0_i32, %c0_i32_0 : i32, i32
  }
  func.func @transform_4(%arg0: i32) -> (i32, i32) {
    %c0_i32 = arith.constant 0 : i32
    %c0_i32_0 = arith.constant 0 : i32
    %c0_i32_1 = arith.constant 0 : i32
    return %c0_i32, %c0_i32_0 : i32, i32
  }
  func.func @transform_5(%arg0: i32) -> (i32, i32) {
    %c0_i32 = arith.constant 0 : i32
    %c0_i32_0 = arith.constant 0 : i32
    %c0_i32_1 = arith.constant 0 : i32
    return %c0_i32, %c0_i32_0 : i32, i32
  }
  func.func @transform_6(%arg0: i32) -> (i32, i32) {
    %c0_i32 = arith.constant 0 : i32
    %c0_i32_0 = arith.constant 0 : i32
    %c0_i32_1 = arith.constant 0 : i32
    return %c0_i32, %c0_i32_0 : i32, i32
  }
  func.func @transform_7(%arg0: i32) -> (i32, i32) {
    %c0_i32 = arith.constant 0 : i32
    %c0_i32_0 = arith.constant 0 : i32
    return %c0_i32, %arg0 : i32, i32
  }
}

</mosaic_0001>

<llo_original>
// kernel: tpu_custom_call.1
$region0: #{tpu_custom_call.1}
  #allocation0 [shape = 'u32[]', space=smem, size = 0x4, offset = 0x4, fixed_abs, tag = 'smem constant byte address 0x4 - core index']
  #allocation1 [shape = 'u32[144,128]{1,0:T(1,128)}', space=vmem, size = 0x12000, scoped, tag = 'internal scratch']
  #allocation2 [shape = 'f32[288,512]{1,0:T(8,128)}', space=vmem, size = 0x90000, scoped, tag = 'scratch operand']
  %s0 = inlined_call_operand.vmem [shape: f32[4,512], index: 0, kind: input, shape index: {}]
  %s1 = inlined_call_operand.vmem [shape: f32[9,1,512], index: 1, kind: input, shape index: {}]
  %s2 = inlined_call_operand.vmem [shape: f32[4,1], index: 2, kind: input, shape index: {}]
  %s3 = inlined_call_operand.vmem [shape: f32[4,1], index: 3, kind: input, shape index: {}]
  %s4 = inlined_call_operand.vmem [shape: f32[32,4], index: 4, kind: input, shape index: {}]
  %s5 = inlined_call_operand.vmem [shape: f32[32,1], index: 5, kind: input, shape index: {}]
  %s6 = inlined_call_operand.vmem [shape: f32[8,288], index: 6, kind: input, shape index: {}]
  %s7 = inlined_call_operand.hbm [shape: f32[8,512], index: 7, kind: output, shape index: {}]
  %s8 = sld [smem:[#allocation0]]
  $region38: #{tpu_custom_call.1} parent=0
    _
  %s10 = ssub.s32 1, %s8
  %s11 = scalar_select 0, %s10, %s8
  $region1: #{tpu_custom_call.1} parent=0
    #allocation3 [shape = 'u8[16384]{0}', space=vmem, size = 0x4000, scoped, tag = 'output window, operand 0, single buffered']
    #allocation4 [shape = 's32[1]{0}', space=sflag, size = 0x4, scoped, tag = 'scoped memory for tpu_custom_call.1']
    %12 = vsyncpa [#allocation4], 0
    // Predicated region
    $region2: #{tpu_custom_call.1} parent=1 // pred_check
      _
    $region3: #{tpu_custom_call.1} parent=1 // pred_check_branch
      %14 = sbr.rel (0) target = $region5
    $region4: #{tpu_custom_call.1} parent=1 // pred_region
      _
    $region5: #{tpu_custom_call.1} parent=1 // pred_fallthru
      _
    // Predicated region
    $region6: #{tpu_custom_call.1} parent=1 // pred_check
      _
    $region7: #{tpu_custom_call.1} parent=1 // pred_check_branch
      %16 = sbr.rel (0) target = $region9
    $region8: #{tpu_custom_call.1} parent=1 // pred_region
      _
    $region9: #{tpu_custom_call.1} parent=1 // pred_fallthru
      _
    // Predicated region
    $region10: #{tpu_custom_call.1} parent=1 // pred_check
      _
    $region11: #{tpu_custom_call.1} parent=1 // pred_check_branch
      %18 = sbr.rel (0) target = $region13
    $region12: #{tpu_custom_call.1} parent=1 // pred_region
      _
    $region13: #{tpu_custom_call.1} parent=1 // pred_fallthru
      _
    // Predicated region
    $region14: #{tpu_custom_call.1} parent=1 // pred_check
      _
    $region15: #{tpu_custom_call.1} parent=1 // pred_check_branch
      %20 = sbr.rel (0) target = $region17
    $region16: #{tpu_custom_call.1} parent=1 // pred_region
      _
    $region17: #{tpu_custom_call.1} parent=1 // pred_fallthru
      _
    // Predicated region
    $region18: #{tpu_custom_call.1} parent=1 // pred_check
      _
    $region19: #{tpu_custom_call.1} parent=1 // pred_check_branch
      %22 = sbr.rel (0) target = $region21
    $region20: #{tpu_custom_call.1} parent=1 // pred_region
      _
    $region21: #{tpu_custom_call.1} parent=1 // pred_fallthru
      _
    // Predicated region
    $region22: #{tpu_custom_call.1} parent=1 // pred_check
      _
    $region23: #{tpu_custom_call.1} parent=1 // pred_check_branch
      %24 = sbr.rel (0) target = $region25
    $region24: #{tpu_custom_call.1} parent=1 // pred_region
      _
    $region25: #{tpu_custom_call.1} parent=1 // pred_fallthru
      _
    // Predicated region
    $region26: #{tpu_custom_call.1} parent=1 // pred_check
      _
    $region27: #{tpu_custom_call.1} parent=1 // pred_check_branch
      %26 = sbr.rel (0) target = $region29
    $region28: #{tpu_custom_call.1} parent=1 // pred_region
      _
    $region29: #{tpu_custom_call.1} parent=1 // pred_fallthru
      _
    %v27 = vld [vmem:[%s0] sm:$0xff]
    %v28 = vld [vmem:[%s0 + $0x8] sm:$0xff]
    %v29 = vld [vmem:[%s2] sm:$0xf]
    %31 = vset.pattern.permute.xlu0 0
    %32 = vperm.xlu0 %31, %v29
    %v33 = vpop.permute.xlu0 %32
    %v35 = vunpack.c.l.s4 839922192
    %v36 = vunpack.c.0.s8 %v35
    %v37 = vlaneseq
    %v38 = vshrl.u32 %v37, 7
    %v39 = vsub.s32 %v36, %v38
    %v40 = vrot.slane %v33, %v39
    %v42 = vmul.f32 %v27, %v40
    %v43 = vmul.f32 %v28, %v40
    %v44 = vld [vmem:[%s3] sm:$0xf]
    %46 = vset.pattern.permute.xlu0 0
    %47 = vperm.xlu0 %46, %v44
    %v48 = vpop.permute.xlu0 %47
    %v50 = vunpack.c.l.s4 839922192
    %v51 = vunpack.c.0.s8 %v50
    %v52 = vlaneseq
    %v53 = vshrl.u32 %v52, 7
    %v54 = vsub.s32 %v51, %v53
    %v55 = vrot.slane %v48, %v54
    %v57 = vadd.f32 %v42, %v55
    %v58 = vadd.f32 %v43, %v55
    %v59 = vmax.f32 %v57, 0.0
    %v60 = vmax.f32 %v58, 0.0
    %v61 = vld [vmem:[%s4] sm:$0xff]
    %v62 = vld [vmem:[%s4 + $0x8] sm:$0xff]
    %v63 = vld [vmem:[%s4 + $0x10] sm:$0xff]
    %v64 = vld [vmem:[%s4 + $0x18] sm:$0xff]
    %66 = vset.pattern.permute.xlu0 0
    %67 = vperm.xlu0 %66, %v61
    %v68 = vpop.permute.xlu0 %67
    %71 = vset.pattern.permute.xlu0 0
    %72 = vperm.xlu0 %71, %v62
    %v73 = vpop.permute.xlu0 %72
    %76 = vset.pattern.permute.xlu0 0
    %77 = vperm.xlu0 %76, %v63
    %v78 = vpop.permute.xlu0 %77
    %81 = vset.pattern.permute.xlu0 0
    %82 = vperm.xlu0 %81, %v64
    %v83 = vpop.permute.xlu0 %82
    %v87 = vlaneseq
    %v88 = vshrl.u32 %v87, 7
    %v89 = vsub.s32 0, %v88
    %v90 = vrot.slane %v59, %v89
    %v91 = vlaneseq
    %v92 = vshrl.u32 %v91, 7
    %v93 = vsub.s32 4, %v92
    %v94 = vrot.slane %v59, %v93
    %v95 = vlaneseq
    %v96 = vshrl.u32 %v95, 7
    %v97 = vsub.s32 0, %v96
    %v98 = vrot.slane %v60, %v97
    %v99 = vlaneseq
    %v100 = vshrl.u32 %v99, 7
    %v101 = vsub.s32 4, %v100
    %v102 = vrot.slane %v60, %v101
    %v107 = vlaneseq
    %v108 = vshrl.u32 %v107, 7
    %v109 = vsub.s32 0, %v108
    %v110 = vrot.slane %v90, %v109
    %v111 = vlaneseq
    %v112 = vshrl.u32 %v111, 7
    %v113 = vsub.s32 0, %v112
    %v114 = vrot.slane %v94, %v113
    %v115 = vlaneseq
    %v116 = vshrl.u32 %v115, 7
    %v117 = vsub.s32 0, %v116
    %v118 = vrot.slane %v98, %v117
    %v119 = vlaneseq
    %v120 = vshrl.u32 %v119, 7
    %v121 = vsub.s32 0, %v120
    %v122 = vrot.slane %v102, %v121
    %v123 = vmul.f32 %v68, %v110
    %v124 = vmul.f32 %v68, %v114
    %v125 = vmul.f32 %v68, %v118
    %v126 = vmul.f32 %v68, %v122
    %v127 = vmul.f32 %v73, %v110
    %v128 = vmul.f32 %v73, %v114
    %v129 = vmul.f32 %v73, %v118
    %v130 = vmul.f32 %v73, %v122
    %v131 = vmul.f32 %v78, %v110
    %v132 = vmul.f32 %v78, %v114
    %v133 = vmul.f32 %v78, %v118
    %v134 = vmul.f32 %v78, %v122
    %v135 = vmul.f32 %v83, %v110
    %v136 = vmul.f32 %v83, %v114
    %v137 = vmul.f32 %v83, %v118
    %v138 = vmul.f32 %v83, %v122
    %139 = vset.pattern.permute.xlu0 1
    %140 = vperm.xlu0 %139, %v61
    %v141 = vpop.permute.xlu0 %140
    %143 = vset.pattern.permute.xlu0 1
    %144 = vperm.xlu0 %143, %v62
    %v145 = vpop.permute.xlu0 %144
    %147 = vset.pattern.permute.xlu0 1
    %148 = vperm.xlu0 %147, %v63
    %v149 = vpop.permute.xlu0 %148
    %151 = vset.pattern.permute.xlu0 1
    %152 = vperm.xlu0 %151, %v64
    %v153 = vpop.permute.xlu0 %152
    %v155 = vlaneseq
    %v156 = vshrl.u32 %v155, 7
    %v157 = vsub.s32 1, %v156
    %v158 = vrot.slane %v59, %v157
    %v159 = vlaneseq
    %v160 = vshrl.u32 %v159, 7
    %v161 = vsub.s32 5, %v160
    %v162 = vrot.slane %v59, %v161
    %v163 = vlaneseq
    %v164 = vshrl.u32 %v163, 7
    %v165 = vsub.s32 1, %v164
    %v166 = vrot.slane %v60, %v165
    %v167 = vlaneseq
    %v168 = vshrl.u32 %v167, 7
    %v169 = vsub.s32 5, %v168
    %v170 = vrot.slane %v60, %v169
    %v175 = vlaneseq
    %v176 = vshrl.u32 %v175, 7
    %v177 = vsub.s32 1, %v176
    %v178 = vrot.slane %v158, %v177
    %v179 = vlaneseq
    %v180 = vshrl.u32 %v179, 7
    %v181 = vsub.s32 1, %v180
    %v182 = vrot.slane %v162, %v181
    %v183 = vlaneseq
    %v184 = vshrl.u32 %v183, 7
    %v185 = vsub.s32 1, %v184
    %v186 = vrot.slane %v166, %v185
    %v187 = vlaneseq
    %v188 = vshrl.u32 %v187, 7
    %v189 = vsub.s32 1, %v188
    %v190 = vrot.slane %v170, %v189
    %v191 = vmul.f32 %v141, %v178
    %v192 = vmul.f32 %v141, %v182
    %v193 = vmul.f32 %v141, %v186
    %v194 = vmul.f32 %v141, %v190
    %v195 = vmul.f32 %v145, %v178
    %v196 = vmul.f32 %v145, %v182
    %v197 = vmul.f32 %v145, %v186
    %v198 = vmul.f32 %v145, %v190
    %v199 = vmul.f32 %v149, %v178
    %v200 = vmul.f32 %v149, %v182
    %v201 = vmul.f32 %v149, %v186
    %v202 = vmul.f32 %v149, %v190
    %v203 = vmul.f32 %v153, %v178
    %v204 = vmul.f32 %v153, %v182
    %v205 = vmul.f32 %v153, %v186
    %v206 = vmul.f32 %v153, %v190
    %v207 = vadd.f32 %v123, %v191
    %v208 = vadd.f32 %v124, %v192
    %v209 = vadd.f32 %v125, %v193
    %v210 = vadd.f32 %v126, %v194
    %v211 = vadd.f32 %v127, %v195
    %v212 = vadd.f32 %v128, %v196
    %v213 = vadd.f32 %v129, %v197
    %v214 = vadd.f32 %v130, %v198
    %v215 = vadd.f32 %v131, %v199
    %v216 = vadd.f32 %v132, %v200
    %v217 = vadd.f32 %v133, %v201
    %v218 = vadd.f32 %v134, %v202
    %v219 = vadd.f32 %v135, %v203
    %v220 = vadd.f32 %v136, %v204
    %v221 = vadd.f32 %v137, %v205
    %v222 = vadd.f32 %v138, %v206
    %223 = vset.pattern.permute.xlu0 2
    %224 = vperm.xlu0 %223, %v61
    %v225 = vpop.permute.xlu0 %224
    %227 = vset.pattern.permute.xlu0 2
    %228 = vperm.xlu0 %227, %v62
    %v229 = vpop.permute.xlu0 %228
    %231 = vset.pattern.permute.xlu0 2
    %232 = vperm.xlu0 %231, %v63
    %v233 = vpop.permute.xlu0 %232
    %235 = vset.pattern.permute.xlu0 2
    %236 = vperm.xlu0 %235, %v64
    %v237 = vpop.permute.xlu0 %236
    %v239 = vlaneseq
    %v240 = vshrl.u32 %v239, 7
    %v241 = vsub.s32 2, %v240
    %v242 = vrot.slane %v59, %v241
    %v243 = vlaneseq
    %v244 = vshrl.u32 %v243, 7
    %v245 = vsub.s32 6, %v244
    %v246 = vrot.slane %v59, %v245
    %v247 = vlaneseq
    %v248 = vshrl.u32 %v247, 7
    %v249 = vsub.s32 2, %v248
    %v250 = vrot.slane %v60, %v249
    %v251 = vlaneseq
    %v252 = vshrl.u32 %v251, 7
    %v253 = vsub.s32 6, %v252
    %v254 = vrot.slane %v60, %v253
    %v259 = vlaneseq
    %v260 = vshrl.u32 %v259, 7
    %v261 = vsub.s32 2, %v260
    %v262 = vrot.slane %v242, %v261
    %v263 = vlaneseq
    %v264 = vshrl.u32 %v263, 7
    %v265 = vsub.s32 2, %v264
    %v266 = vrot.slane %v246, %v265
    %v267 = vlaneseq
    %v268 = vshrl.u32 %v267, 7
    %v269 = vsub.s32 2, %v268
    %v270 = vrot.slane %v250, %v269
    %v271 = vlaneseq
    %v272 = vshrl.u32 %v271, 7
    %v273 = vsub.s32 2, %v272
    %v274 = vrot.slane %v254, %v273
    %v275 = vmul.f32 %v225, %v262
    %v276 = vmul.f32 %v225, %v266
    %v277 = vmul.f32 %v225, %v270
    %v278 = vmul.f32 %v225, %v274
    %v279 = vmul.f32 %v229, %v262
    %v280 = vmul.f32 %v229, %v266
    %v281 = vmul.f32 %v229, %v270
    %v282 = vmul.f32 %v229, %v274
    %v283 = vmul.f32 %v233, %v262
    %v284 = vmul.f32 %v233, %v266
    %v285 = vmul.f32 %v233, %v270
    %v286 = vmul.f32 %v233, %v274
    %v287 = vmul.f32 %v237, %v262
    %v288 = vmul.f32 %v237, %v266
    %v289 = vmul.f32 %v237, %v270
    %v290 = vmul.f32 %v237, %v274
    %v291 = vadd.f32 %v207, %v275
    %v292 = vadd.f32 %v208, %v276
    %v293 = vadd.f32 %v209, %v277
    %v294 = vadd.f32 %v210, %v278
    %v295 = vadd.f32 %v211, %v279
    %v296 = vadd.f32 %v212, %v280
    %v297 = vadd.f32 %v213, %v281
    %v298 = vadd.f32 %v214, %v282
    %v299 = vadd.f32 %v215, %v283
    %v300 = vadd.f32 %v216, %v284
    %v301 = vadd.f32 %v217, %v285
    %v302 = vadd.f32 %v218, %v286
    %v303 = vadd.f32 %v219, %v287
    %v304 = vadd.f32 %v220, %v288
    %v305 = vadd.f32 %v221, %v289
    %v306 = vadd.f32 %v222, %v290
    %307 = vset.pattern.permute.xlu0 3
    %308 = vperm.xlu0 %307, %v61
    %v309 = vpop.permute.xlu0 %308
    %311 = vset.pattern.permute.xlu0 3
    %312 = vperm.xlu0 %311, %v62
    %v313 = vpop.permute.xlu0 %312
    %315 = vset.pattern.permute.xlu0 3
    %316 = vperm.xlu0 %315, %v63
    %v317 = vpop.permute.xlu0 %316
    %319 = vset.pattern.permute.xlu0 3
    %320 = vperm.xlu0 %319, %v64
    %v321 = vpop.permute.xlu0 %320
    %v323 = vlaneseq
    %v324 = vshrl.u32 %v323, 7
    %v325 = vsub.s32 3, %v324
    %v326 = vrot.slane %v59, %v325
    %v327 = vlaneseq
    %v328 = vshrl.u32 %v327, 7
    %v329 = vsub.s32 7, %v328
    %v330 = vrot.slane %v59, %v329
    %v331 = vlaneseq
    %v332 = vshrl.u32 %v331, 7
    %v333 = vsub.s32 3, %v332
    %v334 = vrot.slane %v60, %v333
    %v335 = vlaneseq
    %v336 = vshrl.u32 %v335, 7
    %v337 = vsub.s32 7, %v336
    %v338 = vrot.slane %v60, %v337
    %v343 = vlaneseq
    %v344 = vshrl.u32 %v343, 7
    %v345 = vsub.s32 3, %v344
    %v346 = vrot.slane %v326, %v345
    %v347 = vlaneseq
    %v348 = vshrl.u32 %v347, 7
    %v349 = vsub.s32 3, %v348
    %v350 = vrot.slane %v330, %v349
    %v351 = vlaneseq
    %v352 = vshrl.u32 %v351, 7
    %v353 = vsub.s32 3, %v352
    %v354 = vrot.slane %v334, %v353
    %v355 = vlaneseq
    %v356 = vshrl.u32 %v355, 7
    %v357 = vsub.s32 3, %v356
    %v358 = vrot.slane %v338, %v357
    %v359 = vmul.f32 %v309, %v346
    %v360 = vmul.f32 %v309, %v350
    %v361 = vmul.f32 %v309, %v354
    %v362 = vmul.f32 %v309, %v358
    %v363 = vmul.f32 %v313, %v346
    %v364 = vmul.f32 %v313, %v350
    %v365 = vmul.f32 %v313, %v354
    %v366 = vmul.f32 %v313, %v358
    %v367 = vmul.f32 %v317, %v346
    %v368 = vmul.f32 %v317, %v350
    %v369 = vmul.f32 %v317, %v354
    %v370 = vmul.f32 %v317, %v358
    %v371 = vmul.f32 %v321, %v346
    %v372 = vmul.f32 %v321, %v350
    %v373 = vmul.f32 %v321, %v354
    %v374 = vmul.f32 %v321, %v358
    %v375 = vadd.f32 %v291, %v359
    %v376 = vadd.f32 %v292, %v360
    %v377 = vadd.f32 %v293, %v361
    %v378 = vadd.f32 %v294, %v362
    %v379 = vadd.f32 %v295, %v363
    %v380 = vadd.f32 %v296, %v364
    %v381 = vadd.f32 %v297, %v365
    %v382 = vadd.f32 %v298, %v366
    %v383 = vadd.f32 %v299, %v367
    %v384 = vadd.f32 %v300, %v368
    %v385 = vadd.f32 %v301, %v369
    %v386 = vadd.f32 %v302, %v370
    %v387 = vadd.f32 %v303, %v371
    %v388 = vadd.f32 %v304, %v372
    %v389 = vadd.f32 %v305, %v373
    %v390 = vadd.f32 %v306, %v374
    %v391 = vld [vmem:[%s5] sm:$0xff]
    %v392 = vld [vmem:[%s5 + $0x8] sm:$0xff]
    %v393 = vld [vmem:[%s5 + $0x10] sm:$0xff]
    %v394 = vld [vmem:[%s5 + $0x18] sm:$0xff]
    %396 = vset.pattern.permute.xlu0 0
    %397 = vperm.xlu0 %396, %v391
    %v398 = vpop.permute.xlu0 %397
    %401 = vset.pattern.permute.xlu0 0
    %402 = vperm.xlu0 %401, %v392
    %v403 = vpop.permute.xlu0 %402
    %406 = vset.pattern.permute.xlu0 0
    %407 = vperm.xlu0 %406, %v393
    %v408 = vpop.permute.xlu0 %407
    %411 = vset.pattern.permute.xlu0 0
    %412 = vperm.xlu0 %411, %v394
    %v413 = vpop.permute.xlu0 %412
    %v415 = vadd.f32 %v375, %v398
    %v416 = vadd.f32 %v376, %v398
    %v417 = vadd.f32 %v377, %v398
    %v418 = vadd.f32 %v378, %v398
    %v419 = vadd.f32 %v379, %v403
    %v420 = vadd.f32 %v380, %v403
    %v421 = vadd.f32 %v381, %v403
    %v422 = vadd.f32 %v382, %v403
    %v423 = vadd.f32 %v383, %v408
    %v424 = vadd.f32 %v384, %v408
    %v425 = vadd.f32 %v385, %v408
    %v426 = vadd.f32 %v386, %v408
    %v427 = vadd.f32 %v387, %v413
    %v428 = vadd.f32 %v388, %v413
    %v429 = vadd.f32 %v389, %v413
    %v430 = vadd.f32 %v390, %v413
    %v431 = vmax.f32 %v415, 0.0
    %v432 = vmax.f32 %v416, 0.0
    %v433 = vmax.f32 %v417, 0.0
    %v434 = vmax.f32 %v418, 0.0
    %v435 = vmax.f32 %v419, 0.0
    %v436 = vmax.f32 %v420, 0.0
    %v437 = vmax.f32 %v421, 0.0
    %v438 = vmax.f32 %v422, 0.0
    %v439 = vmax.f32 %v423, 0.0
    %v440 = vmax.f32 %v424, 0.0
    %v441 = vmax.f32 %v425, 0.0
    %v442 = vmax.f32 %v426, 0.0
    %v443 = vmax.f32 %v427, 0.0
    %v444 = vmax.f32 %v428, 0.0
    %v445 = vmax.f32 %v429, 0.0
    %v446 = vmax.f32 %v430, 0.0
    %447 = vrot.lane.b32.xlu0 %v431, 17
    %v448 = vpop.permute.xlu0 %447
    %449 = vrot.lane.b32.xlu0 %v435, 17
    %v450 = vpop.permute.xlu0 %449
    %451 = vrot.lane.b32.xlu0 %v439, 17
    %v452 = vpop.permute.xlu0 %451
    %453 = vrot.lane.b32.xlu0 %v443, 17
    %v454 = vpop.permute.xlu0 %453
    %455 = vrot.lane.b32.xlu0 %v432, 17
    %v456 = vpop.permute.xlu0 %455
    %457 = vrot.lane.b32.xlu0 %v436, 17
    %v458 = vpop.permute.xlu0 %457
    %459 = vrot.lane.b32.xlu0 %v440, 17
    %v460 = vpop.permute.xlu0 %459
    %461 = vrot.lane.b32.xlu0 %v444, 17
    %v462 = vpop.permute.xlu0 %461
    %463 = vrot.lane.b32.xlu0 %v433, 17
    %v464 = vpop.permute.xlu0 %463
    %465 = vrot.lane.b32.xlu0 %v437, 17
    %v466 = vpop.permute.xlu0 %465
    %467 = vrot.lane.b32.xlu0 %v441, 17
    %v468 = vpop.permute.xlu0 %467
    %469 = vrot.lane.b32.xlu0 %v445, 17
    %v470 = vpop.permute.xlu0 %469
    %471 = vrot.lane.b32.xlu0 %v434, 17
    %v472 = vpop.permute.xlu0 %471
    %473 = vrot.lane.b32.xlu0 %v438, 17
    %v474 = vpop.permute.xlu0 %473
    %475 = vrot.lane.b32.xlu0 %v442, 17
    %v476 = vpop.permute.xlu0 %475
    %477 = vrot.lane.b32.xlu0 %v446, 17
    %v478 = vpop.permute.xlu0 %477
    %v479 = vlaneseq
    %v480 = vand.u32 %v479, 127
    %vm481 = vcmp.lt.s32.totalorder %v480, 17
    %v482 = vsel %vm481, %v464, %v472
    %v483 = vsel %vm481, %v466, %v474
    %v484 = vsel %vm481, %v468, %v476
    %v485 = vsel %vm481, %v470, %v478
    %v486 = vsel %vm481, %v456, %v464
    %v487 = vsel %vm481, %v458, %v466
    %v488 = vsel %vm481, %v460, %v468
    %v489 = vsel %vm481, %v462, %v470
    %v490 = vsel %vm481, %v448, %v456
    %v491 = vsel %vm481, %v450, %v458
    %v492 = vsel %vm481, %v452, %v460
    %v493 = vsel %vm481, %v454, %v462
    %v494 = vsel %vm481, %v472, %v448
    %v495 = vsel %vm481, %v474, %v450
    %v496 = vsel %vm481, %v476, %v452
    %v497 = vsel %vm481, %v478, %v454
    %v498 = vld [vmem:[%s1] sm:$0xf]
    %v500 = vlaneseq
    %v501 = vshrl.u32 %v500, 7
    %v502 = vsub.s32 0, %v501
    %v503 = vrot.slane %v498, %v502
    %v504 = vlaneseq
    %v505 = vshrl.u32 %v504, 7
    %v506 = vsub.s32 1, %v505
    %v507 = vrot.slane %v498, %v506
    %v508 = vlaneseq
    %v509 = vshrl.u32 %v508, 7
    %v510 = vsub.s32 2, %v509
    %v511 = vrot.slane %v498, %v510
    %v512 = vlaneseq
    %v513 = vshrl.u32 %v512, 7
    %v514 = vsub.s32 3, %v513
    %v515 = vrot.slane %v498, %v514
    %v520 = vmul.f32 %v494, %v503
    %v521 = vmul.f32 %v490, %v507
    %v522 = vmul.f32 %v486, %v511
    %v523 = vmul.f32 %v482, %v515
    %v524 = vmul.f32 %v495, %v503
    %v525 = vmul.f32 %v491, %v507
    %v526 = vmul.f32 %v487, %v511
    %v527 = vmul.f32 %v483, %v515
    %v528 = vmul.f32 %v496, %v503
    %v529 = vmul.f32 %v492, %v507
    %v530 = vmul.f32 %v488, %v511
    %v531 = vmul.f32 %v484, %v515
    %v532 = vmul.f32 %v497, %v503
    %v533 = vmul.f32 %v493, %v507
    %v534 = vmul.f32 %v489, %v511
    %v535 = vmul.f32 %v485, %v515
    %536 = vst [vmem:[#allocation2] sm:$0xff] %v520
    %537 = vst [vmem:[#allocation2 + $0x8] sm:$0xff] %v521
    %538 = vst [vmem:[#allocation2 + $0x10] sm:$0xff] %v522
    %539 = vst [vmem:[#allocation2 + $0x18] sm:$0xff] %v523
    %540 = vst [vmem:[#allocation2 + $0x20] sm:$0xff] %v524
    %541 = vst [vmem:[#allocation2 + $0x28] sm:$0xff] %v525
    %542 = vst [vmem:[#allocation2 + $0x30] sm:$0xff] %v526
    %543 = vst [vmem:[#allocation2 + $0x38] sm:$0xff] %v527
    %544 = vst [vmem:[#allocation2 + $0x40] sm:$0xff] %v528
    %545 = vst [vmem:[#allocation2 + $0x48] sm:$0xff] %v529
    %546 = vst [vmem:[#allocation2 + $0x50] sm:$0xff] %v530
    %547 = vst [vmem:[#allocation2 + $0x58] sm:$0xff] %v531
    %548 = vst [vmem:[#allocation2 + $0x60] sm:$0xff] %v532
    %549 = vst [vmem:[#allocation2 + $0x68] sm:$0xff] %v533
    %550 = vst [vmem:[#allocation2 + $0x70] sm:$0xff] %v534
    %551 = vst [vmem:[#allocation2 + $0x78] sm:$0xff] %v535
    %552 = vrot.lane.b32.xlu0 %v431, 16
    %v553 = vpop.permute.xlu0 %552
    %554 = vrot.lane.b32.xlu0 %v435, 16
    %v555 = vpop.permute.xlu0 %554
    %556 = vrot.lane.b32.xlu0 %v439, 16
    %v557 = vpop.permute.xlu0 %556
    %558 = vrot.lane.b32.xlu0 %v443, 16
    %v559 = vpop.permute.xlu0 %558
    %560 = vrot.lane.b32.xlu0 %v432, 16
    %v561 = vpop.permute.xlu0 %560
    %562 = vrot.lane.b32.xlu0 %v436, 16
    %v563 = vpop.permute.xlu0 %562
    %564 = vrot.lane.b32.xlu0 %v440, 16
    %v565 = vpop.permute.xlu0 %564
    %566 = vrot.lane.b32.xlu0 %v444, 16
    %v567 = vpop.permute.xlu0 %566
    %568 = vrot.lane.b32.xlu0 %v433, 16
    %v569 = vpop.permute.xlu0 %568
    %570 = vrot.lane.b32.xlu0 %v437, 16
    %v571 = vpop.permute.xlu0 %570
    %572 = vrot.lane.b32.xlu0 %v441, 16
    %v573 = vpop.permute.xlu0 %572
    %574 = vrot.lane.b32.xlu0 %v445, 16
    %v575 = vpop.permute.xlu0 %574
    %576 = vrot.lane.b32.xlu0 %v434, 16
    %v577 = vpop.permute.xlu0 %576
    %578 = vrot.lane.b32.xlu0 %v438, 16
    %v579 = vpop.permute.xlu0 %578
    %580 = vrot.lane.b32.xlu0 %v442, 16
    %v581 = vpop.permute.xlu0 %580
    %582 = vrot.lane.b32.xlu0 %v446, 16
    %v583 = vpop.permute.xlu0 %582
    %vm584 = vcmp.lt.s32.totalorder %v480, 16
    %v585 = vsel %vm584, %v569, %v577
    %v586 = vsel %vm584, %v571, %v579
    %v587 = vsel %vm584, %v573, %v581
    %v588 = vsel %vm584, %v575, %v583
    %v589 = vsel %vm584, %v561, %v569
    %v590 = vsel %vm584, %v563, %v571
    %v591 = vsel %vm584, %v565, %v573
    %v592 = vsel %vm584, %v567, %v575
    %v593 = vsel %vm584, %v553, %v561
    %v594 = vsel %vm584, %v555, %v563
    %v595 = vsel %vm584, %v557, %v565
    %v596 = vsel %vm584, %v559, %v567
    %v597 = vsel %vm584, %v577, %v553
    %v598 = vsel %vm584, %v579, %v555
    %v599 = vsel %vm584, %v581, %v557
    %v600 = vsel %vm584, %v583, %v559
    %s601 = scalar_lea.vmem %s1, 4
    %v602 = vld [vmem:[%s601] sm:$0xf]
    %v604 = vlaneseq
    %v605 = vshrl.u32 %v604, 7
    %v606 = vsub.s32 0, %v605
    %v607 = vrot.slane %v602, %v606
    %v608 = vlaneseq
    %v609 = vshrl.u32 %v608, 7
    %v610 = vsub.s32 1, %v609
    %v611 = vrot.slane %v602, %v610
    %v612 = vlaneseq
    %v613 = vshrl.u32 %v612, 7
    %v614 = vsub.s32 2, %v613
    %v615 = vrot.slane %v602, %v614
    %v616 = vlaneseq
    %v617 = vshrl.u32 %v616, 7
    %v618 = vsub.s32 3, %v617
    %v619 = vrot.slane %v602, %v618
    %v624 = vmul.f32 %v597, %v607
    %v625 = vmul.f32 %v593, %v611
    %v626 = vmul.f32 %v589, %v615
    %v627 = vmul.f32 %v585, %v619
    %v628 = vmul.f32 %v598, %v607
    %v629 = vmul.f32 %v594, %v611
    %v630 = vmul.f32 %v590, %v615
    %v631 = vmul.f32 %v586, %v619
    %v632 = vmul.f32 %v599, %v607
    %v633 = vmul.f32 %v595, %v611
    %v634 = vmul.f32 %v591, %v615
    %v635 = vmul.f32 %v587, %v619
    %v636 = vmul.f32 %v600, %v607
    %v637 = vmul.f32 %v596, %v611
    %v638 = vmul.f32 %v592, %v615
    %v639 = vmul.f32 %v588, %v619
    %640 = vst [vmem:[#allocation2 + $0x80] sm:$0xff] %v624
    %641 = vst [vmem:[#allocation2 + $0x88] sm:$0xff] %v625
    %642 = vst [vmem:[#allocation2 + $0x90] sm:$0xff] %v626
    %643 = vst [vmem:[#allocation2 + $0x98] sm:$0xff] %v627
    %644 = vst [vmem:[#allocation2 + $0xa0] sm:$0xff] %v628
    %645 = vst [vmem:[#allocation2 + $0xa8] sm:$0xff] %v629
    %646 = vst [vmem:[#allocation2 + $0xb0] sm:$0xff] %v630
    %647 = vst [vmem:[#allocation2 + $0xb8] sm:$0xff] %v631
    %648 = vst [vmem:[#allocation2 + $0xc0] sm:$0xff] %v632
    %649 = vst [vmem:[#allocation2 + $0xc8] sm:$0xff] %v633
    %650 = vst [vmem:[#allocation2 + $0xd0] sm:$0xff] %v634
    %651 = vst [vmem:[#allocation2 + $0xd8] sm:$0xff] %v635
    %652 = vst [vmem:[#allocation2 + $0xe0] sm:$0xff] %v636
    %653 = vst [vmem:[#allocation2 + $0xe8] sm:$0xff] %v637
    %654 = vst [vmem:[#allocation2 + $0xf0] sm:$0xff] %v638
    %655 = vst [vmem:[#allocation2 + $0xf8] sm:$0xff] %v639
    %656 = vrot.lane.b32.xlu0 %v431, 15
    %v657 = vpop.permute.xlu0 %656
    %658 = vrot.lane.b32.xlu0 %v435, 15
    %v659 = vpop.permute.xlu0 %658
    %660 = vrot.lane.b32.xlu0 %v439, 15
    %v661 = vpop.permute.xlu0 %660
    %662 = vrot.lane.b32.xlu0 %v443, 15
    %v663 = vpop.permute.xlu0 %662
    %664 = vrot.lane.b32.xlu0 %v432, 15
    %v665 = vpop.permute.xlu0 %664
    %666 = vrot.lane.b32.xlu0 %v436, 15
    %v667 = vpop.permute.xlu0 %666
    %668 = vrot.lane.b32.xlu0 %v440, 15
    %v669 = vpop.permute.xlu0 %668
    %670 = vrot.lane.b32.xlu0 %v444, 15
    %v671 = vpop.permute.xlu0 %670
    %672 = vrot.lane.b32.xlu0 %v433, 15
    %v673 = vpop.permute.xlu0 %672
    %674 = vrot.lane.b32.xlu0 %v437, 15
    %v675 = vpop.permute.xlu0 %674
    %676 = vrot.lane.b32.xlu0 %v441, 15
    %v677 = vpop.permute.xlu0 %676
    %678 = vrot.lane.b32.xlu0 %v445, 15
    %v679 = vpop.permute.xlu0 %678
    %680 = vrot.lane.b32.xlu0 %v434, 15
    %v681 = vpop.permute.xlu0 %680
    %682 = vrot.lane.b32.xlu0 %v438, 15
    %v683 = vpop.permute.xlu0 %682
    %684 = vrot.lane.b32.xlu0 %v442, 15
    %v685 = vpop.permute.xlu0 %684
    %686 = vrot.lane.b32.xlu0 %v446, 15
    %v687 = vpop.permute.xlu0 %686
    %vm688 = vcmp.lt.s32.totalorder %v480, 15
    %v689 = vsel %vm688, %v673, %v681
    %v690 = vsel %vm688, %v675, %v683
    %v691 = vsel %vm688, %v677, %v685
    %v692 = vsel %vm688, %v679, %v687
    %v693 = vsel %vm688, %v665, %v673
    %v694 = vsel %vm688, %v667, %v675
    %v695 = vsel %vm688, %v669, %v677
    %v696 = vsel %vm688, %v671, %v679
    %v697 = vsel %vm688, %v657, %v665
    %v698 = vsel %vm688, %v659, %v667
    %v699 = vsel %vm688, %v661, %v669
    %v700 = vsel %vm688, %v663, %v671
    %v701 = vsel %vm688, %v681, %v657
    %v702 = vsel %vm688, %v683, %v659
    %v703 = vsel %vm688, %v685, %v661
    %v704 = vsel %vm688, %v687, %v663
    %s705 = scalar_lea.vmem %s1, 8
    %v706 = vld [vmem:[%s705] sm:$0xf]
    %v708 = vlaneseq
    %v709 = vshrl.u32 %v708, 7
    %v710 = vsub.s32 0, %v709
    %v711 = vrot.slane %v706, %v710
    %v712 = vlaneseq
    %v713 = vshrl.u32 %v712, 7
    %v714 = vsub.s32 1, %v713
    %v715 = vrot.slane %v706, %v714
    %v716 = vlaneseq
    %v717 = vshrl.u32 %v716, 7
    %v718 = vsub.s32 2, %v717
    %v719 = vrot.slane %v706, %v718
    %v720 = vlaneseq
    %v721 = vshrl.u32 %v720, 7
    %v722 = vsub.s32 3, %v721
    %v723 = vrot.slane %v706, %v722
    %v728 = vmul.f32 %v701, %v711
    %v729 = vmul.f32 %v697, %v715
    %v730 = vmul.f32 %v693, %v719
    %v731 = vmul.f32 %v689, %v723
    %v732 = vmul.f32 %v702, %v711
    %v733 = vmul.f32 %v698, %v715
    %v734 = vmul.f32 %v694, %v719
    %v735 = vmul.f32 %v690, %v723
    %v736 = vmul.f32 %v703, %v711
    %v737 = vmul.f32 %v699, %v715
    %v738 = vmul.f32 %v695, %v719
    %v739 = vmul.f32 %v691, %v723
    %v740 = vmul.f32 %v704, %v711
    %v741 = vmul.f32 %v700, %v715
    %v742 = vmul.f32 %v696, %v719
    %v743 = vmul.f32 %v692, %v723
    %744 = vst [vmem:[#allocation2 + $0x100] sm:$0xff] %v728
    %745 = vst [vmem:[#allocation2 + $0x108] sm:$0xff] %v729
    %746 = vst [vmem:[#allocation2 + $0x110] sm:$0xff] %v730
    %747 = vst [vmem:[#allocation2 + $0x118] sm:$0xff] %v731
    %748 = vst [vmem:[#allocation2 + $0x120] sm:$0xff] %v732
    %749 = vst [vmem:[#allocation2 + $0x128] sm:$0xff] %v733
    %750 = vst [vmem:[#allocation2 + $0x130] sm:$0xff] %v734
    %751 = vst [vmem:[#allocation2 + $0x138] sm:$0xff] %v735
    %752 = vst [vmem:[#allocation2 + $0x140] sm:$0xff] %v736
    %753 = vst [vmem:[#allocation2 + $0x148] sm:$0xff] %v737
    %754 = vst [vmem:[#allocation2 + $0x150] sm:$0xff] %v738
    %755 = vst [vmem:[#allocation2 + $0x158] sm:$0xff] %v739
    %756 = vst [vmem:[#allocation2 + $0x160] sm:$0xff] %v740
    %757 = vst [vmem:[#allocation2 + $0x168] sm:$0xff] %v741
    %758 = vst [vmem:[#allocation2 + $0x170] sm:$0xff] %v742
    %759 = vst [vmem:[#allocation2 + $0x178] sm:$0xff] %v743
    %760 = vrot.lane.b32.xlu0 %v431, 1
    %v761 = vpop.permute.xlu0 %760
    %762 = vrot.lane.b32.xlu0 %v435, 1
    %v763 = vpop.permute.xlu0 %762
    %764 = vrot.lane.b32.xlu0 %v439, 1
    %v765 = vpop.permute.xlu0 %764
    %766 = vrot.lane.b32.xlu0 %v443, 1
    %v767 = vpop.permute.xlu0 %766
    %768 = vrot.lane.b32.xlu0 %v432, 1
    %v769 = vpop.permute.xlu0 %768
    %770 = vrot.lane.b32.xlu0 %v436, 1
    %v771 = vpop.permute.xlu0 %770
    %772 = vrot.lane.b32.xlu0 %v440, 1
    %v773 = vpop.permute.xlu0 %772
    %774 = vrot.lane.b32.xlu0 %v444, 1
    %v775 = vpop.permute.xlu0 %774
    %776 = vrot.lane.b32.xlu0 %v433, 1
    %v777 = vpop.permute.xlu0 %776
    %778 = vrot.lane.b32.xlu0 %v437, 1
    %v779 = vpop.permute.xlu0 %778
    %780 = vrot.lane.b32.xlu0 %v441, 1
    %v781 = vpop.permute.xlu0 %780
    %782 = vrot.lane.b32.xlu0 %v445, 1
    %v783 = vpop.permute.xlu0 %782
    %784 = vrot.lane.b32.xlu0 %v434, 1
    %v785 = vpop.permute.xlu0 %784
    %786 = vrot.lane.b32.xlu0 %v438, 1
    %v787 = vpop.permute.xlu0 %786
    %788 = vrot.lane.b32.xlu0 %v442, 1
    %v789 = vpop.permute.xlu0 %788
    %790 = vrot.lane.b32.xlu0 %v446, 1
    %v791 = vpop.permute.xlu0 %790
    %vm792 = vcmp.lt.s32.totalorder %v480, 1
    %v793 = vsel %vm792, %v777, %v785
    %v794 = vsel %vm792, %v779, %v787
    %v795 = vsel %vm792, %v781, %v789
    %v796 = vsel %vm792, %v783, %v791
    %v797 = vsel %vm792, %v769, %v777
    %v798 = vsel %vm792, %v771, %v779
    %v799 = vsel %vm792, %v773, %v781
    %v800 = vsel %vm792, %v775, %v783
    %v801 = vsel %vm792, %v761, %v769
    %v802 = vsel %vm792, %v763, %v771
    %v803 = vsel %vm792, %v765, %v773
    %v804 = vsel %vm792, %v767, %v775
    %v805 = vsel %vm792, %v785, %v761
    %v806 = vsel %vm792, %v787, %v763
    %v807 = vsel %vm792, %v789, %v765
    %v808 = vsel %vm792, %v791, %v767
    %s809 = scalar_lea.vmem %s1, 12
    %v810 = vld [vmem:[%s809] sm:$0xf]
    %v812 = vlaneseq
    %v813 = vshrl.u32 %v812, 7
    %v814 = vsub.s32 0, %v813
    %v815 = vrot.slane %v810, %v814
    %v816 = vlaneseq
    %v817 = vshrl.u32 %v816, 7
    %v818 = vsub.s32 1, %v817
    %v819 = vrot.slane %v810, %v818
    %v820 = vlaneseq
    %v821 = vshrl.u32 %v820, 7
    %v822 = vsub.s32 2, %v821
    %v823 = vrot.slane %v810, %v822
    %v824 = vlaneseq
    %v825 = vshrl.u32 %v824, 7
    %v826 = vsub.s32 3, %v825
    %v827 = vrot.slane %v810, %v826
    %v832 = vmul.f32 %v805, %v815
    %v833 = vmul.f32 %v801, %v819
    %v834 = vmul.f32 %v797, %v823
    %v835 = vmul.f32 %v793, %v827
    %v836 = vmul.f32 %v806, %v815
    %v837 = vmul.f32 %v802, %v819
    %v838 = vmul.f32 %v798, %v823
    %v839 = vmul.f32 %v794, %v827
    %v840 = vmul.f32 %v807, %v815
    %v841 = vmul.f32 %v803, %v819
    %v842 = vmul.f32 %v799, %v823
    %v843 = vmul.f32 %v795, %v827
    %v844 = vmul.f32 %v808, %v815
    %v845 = vmul.f32 %v804, %v819
    %v846 = vmul.f32 %v800, %v823
    %v847 = vmul.f32 %v796, %v827
    %848 = vst [vmem:[#allocation2 + $0x180] sm:$0xff] %v832
    %849 = vst [vmem:[#allocation2 + $0x188] sm:$0xff] %v833
    %850 = vst [vmem:[#allocation2 + $0x190] sm:$0xff] %v834
    %851 = vst [vmem:[#allocation2 + $0x198] sm:$0xff] %v835
    %852 = vst [vmem:[#allocation2 + $0x1a0] sm:$0xff] %v836
    %853 = vst [vmem:[#allocation2 + $0x1a8] sm:$0xff] %v837
    %854 = vst [vmem:[#allocation2 + $0x1b0] sm:$0xff] %v838
    %855 = vst [vmem:[#allocation2 + $0x1b8] sm:$0xff] %v839
    %856 = vst [vmem:[#allocation2 + $0x1c0] sm:$0xff] %v840
    %857 = vst [vmem:[#allocation2 + $0x1c8] sm:$0xff] %v841
    %858 = vst [vmem:[#allocation2 + $0x1d0] sm:$0xff] %v842
    %859 = vst [vmem:[#allocation2 + $0x1d8] sm:$0xff] %v843
    %860 = vst [vmem:[#allocation2 + $0x1e0] sm:$0xff] %v844
    %861 = vst [vmem:[#allocation2 + $0x1e8] sm:$0xff] %v845
    %862 = vst [vmem:[#allocation2 + $0x1f0] sm:$0xff] %v846
    %863 = vst [vmem:[#allocation2 + $0x1f8] sm:$0xff] %v847
    %864 = vst [vmem:[#allocation2 + $0x200] sm:$0xff] %v431
    %865 = vst [vmem:[#allocation2 + $0x208] sm:$0xff] %v432
    %866 = vst [vmem:[#allocation2 + $0x210] sm:$0xff] %v433
    %867 = vst [vmem:[#allocation2 + $0x218] sm:$0xff] %v434
    %868 = vst [vmem:[#allocation2 + $0x220] sm:$0xff] %v435
    %869 = vst [vmem:[#allocation2 + $0x228] sm:$0xff] %v436
    %870 = vst [vmem:[#allocation2 + $0x230] sm:$0xff] %v437
    %871 = vst [vmem:[#allocation2 + $0x238] sm:$0xff] %v438
    %872 = vst [vmem:[#allocation2 + $0x240] sm:$0xff] %v439
    %873 = vst [vmem:[#allocation2 + $0x248] sm:$0xff] %v440
    %874 = vst [vmem:[#allocation2 + $0x250] sm:$0xff] %v441
    %875 = vst [vmem:[#allocation2 + $0x258] sm:$0xff] %v442
    %876 = vst [vmem:[#allocation2 + $0x260] sm:$0xff] %v443
    %877 = vst [vmem:[#allocation2 + $0x268] sm:$0xff] %v444
    %878 = vst [vmem:[#allocation2 + $0x270] sm:$0xff] %v445
    %879 = vst [vmem:[#allocation2 + $0x278] sm:$0xff] %v446
    %880 = vrot.lane.b32.xlu0 %v431, 127
    %v881 = vpop.permute.xlu0 %880
    %882 = vrot.lane.b32.xlu0 %v435, 127
    %v883 = vpop.permute.xlu0 %882
    %884 = vrot.lane.b32.xlu0 %v439, 127
    %v885 = vpop.permute.xlu0 %884
    %886 = vrot.lane.b32.xlu0 %v443, 127
    %v887 = vpop.permute.xlu0 %886
    %888 = vrot.lane.b32.xlu0 %v432, 127
    %v889 = vpop.permute.xlu0 %888
    %890 = vrot.lane.b32.xlu0 %v436, 127
    %v891 = vpop.permute.xlu0 %890
    %892 = vrot.lane.b32.xlu0 %v440, 127
    %v893 = vpop.permute.xlu0 %892
    %894 = vrot.lane.b32.xlu0 %v444, 127
    %v895 = vpop.permute.xlu0 %894
    %896 = vrot.lane.b32.xlu0 %v433, 127
    %v897 = vpop.permute.xlu0 %896
    %898 = vrot.lane.b32.xlu0 %v437, 127
    %v899 = vpop.permute.xlu0 %898
    %900 = vrot.lane.b32.xlu0 %v441, 127
    %v901 = vpop.permute.xlu0 %900
    %902 = vrot.lane.b32.xlu0 %v445, 127
    %v903 = vpop.permute.xlu0 %902
    %904 = vrot.lane.b32.xlu0 %v434, 127
    %v905 = vpop.permute.xlu0 %904
    %906 = vrot.lane.b32.xlu0 %v438, 127
    %v907 = vpop.permute.xlu0 %906
    %908 = vrot.lane.b32.xlu0 %v442, 127
    %v909 = vpop.permute.xlu0 %908
    %910 = vrot.lane.b32.xlu0 %v446, 127
    %v911 = vpop.permute.xlu0 %910
    %vm912 = vcmp.lt.s32.totalorder %v480, 127
    %v913 = vsel %vm912, %v897, %v905
    %v914 = vsel %vm912, %v899, %v907
    %v915 = vsel %vm912, %v901, %v909
    %v916 = vsel %vm912, %v903, %v911
    %v917 = vsel %vm912, %v889, %v897
    %v918 = vsel %vm912, %v891, %v899
    %v919 = vsel %vm912, %v893, %v901
    %v920 = vsel %vm912, %v895, %v903
    %v921 = vsel %vm912, %v881, %v889
    %v922 = vsel %vm912, %v883, %v891
    %v923 = vsel %vm912, %v885, %v893
    %v924 = vsel %vm912, %v887, %v895
    %v925 = vsel %vm912, %v905, %v881
    %v926 = vsel %vm912, %v907, %v883
    %v927 = vsel %vm912, %v909, %v885
    %v928 = vsel %vm912, %v911, %v887
    %s929 = scalar_lea.vmem %s1, 20
    %v930 = vld [vmem:[%s929] sm:$0xf]
    %v932 = vlaneseq
    %v933 = vshrl.u32 %v932, 7
    %v934 = vsub.s32 0, %v933
    %v935 = vrot.slane %v930, %v934
    %v936 = vlaneseq
    %v937 = vshrl.u32 %v936, 7
    %v938 = vsub.s32 1, %v937
    %v939 = vrot.slane %v930, %v938
    %v940 = vlaneseq
    %v941 = vshrl.u32 %v940, 7
    %v942 = vsub.s32 2, %v941
    %v943 = vrot.slane %v930, %v942
    %v944 = vlaneseq
    %v945 = vshrl.u32 %v944, 7
    %v946 = vsub.s32 3, %v945
    %v947 = vrot.slane %v930, %v946
    %v952 = vmul.f32 %v921, %v935
    %v953 = vmul.f32 %v917, %v939
    %v954 = vmul.f32 %v913, %v943
    %v955 = vmul.f32 %v925, %v947
    %v956 = vmul.f32 %v922, %v935
    %v957 = vmul.f32 %v918, %v939
    %v958 = vmul.f32 %v914, %v943
    %v959 = vmul.f32 %v926, %v947
    %v960 = vmul.f32 %v923, %v935
    %v961 = vmul.f32 %v919, %v939
    %v962 = vmul.f32 %v915, %v943
    %v963 = vmul.f32 %v927, %v947
    %v964 = vmul.f32 %v924, %v935
    %v965 = vmul.f32 %v920, %v939
    %v966 = vmul.f32 %v916, %v943
    %v967 = vmul.f32 %v928, %v947
    %968 = vst [vmem:[#allocation2 + $0x280] sm:$0xff] %v952
    %969 = vst [vmem:[#allocation2 + $0x288] sm:$0xff] %v953
    %970 = vst [vmem:[#allocation2 + $0x290] sm:$0xff] %v954
    %971 = vst [vmem:[#allocation2 + $0x298] sm:$0xff] %v955
    %972 = vst [vmem:[#allocation2 + $0x2a0] sm:$0xff] %v956
    %973 = vst [vmem:[#allocation2 + $0x2a8] sm:$0xff] %v957
    %974 = vst [vmem:[#allocation2 + $0x2b0] sm:$0xff] %v958
    %975 = vst [vmem:[#allocation2 + $0x2b8] sm:$0xff] %v959
    %976 = vst [vmem:[#allocation2 + $0x2c0] sm:$0xff] %v960
    %977 = vst [vmem:[#allocation2 + $0x2c8] sm:$0xff] %v961
    %978 = vst [vmem:[#allocation2 + $0x2d0] sm:$0xff] %v962
    %979 = vst [vmem:[#allocation2 + $0x2d8] sm:$0xff] %v963
    %980 = vst [vmem:[#allocation2 + $0x2e0] sm:$0xff] %v964
    %981 = vst [vmem:[#allocation2 + $0x2e8] sm:$0xff] %v965
    %982 = vst [vmem:[#allocation2 + $0x2f0] sm:$0xff] %v966
    %983 = vst [vmem:[#allocation2 + $0x2f8] sm:$0xff] %v967
    %984 = vrot.lane.b32.xlu0 %v431, 113
    %v985 = vpop.permute.xlu0 %984
    %986 = vrot.lane.b32.xlu0 %v435, 113
    %v987 = vpop.permute.xlu0 %986
    %988 = vrot.lane.b32.xlu0 %v439, 113
    %v989 = vpop.permute.xlu0 %988
    %990 = vrot.lane.b32.xlu0 %v443, 113
    %v991 = vpop.permute.xlu0 %990
    %992 = vrot.lane.b32.xlu0 %v432, 113
    %v993 = vpop.permute.xlu0 %992
    %994 = vrot.lane.b32.xlu0 %v436, 113
    %v995 = vpop.permute.xlu0 %994
    %996 = vrot.lane.b32.xlu0 %v440, 113
    %v997 = vpop.permute.xlu0 %996
    %998 = vrot.lane.b32.xlu0 %v444, 113
    %v999 = vpop.permute.xlu0 %998
    %1000 = vrot.lane.b32.xlu0 %v433, 113
    %v1001 = vpop.permute.xlu0 %1000
    %1002 = vrot.lane.b32.xlu0 %v437, 113
    %v1003 = vpop.permute.xlu0 %1002
    %1004 = vrot.lane.b32.xlu0 %v441, 113
    %v1005 = vpop.permute.xlu0 %1004
    %1006 = vrot.lane.b32.xlu0 %v445, 113
    %v1007 = vpop.permute.xlu0 %1006
    %1008 = vrot.lane.b32.xlu0 %v434, 113
    %v1009 = vpop.permute.xlu0 %1008
    %1010 = vrot.lane.b32.xlu0 %v438, 113
    %v1011 = vpop.permute.xlu0 %1010
    %1012 = vrot.lane.b32.xlu0 %v442, 113
    %v1013 = vpop.permute.xlu0 %1012
    %1014 = vrot.lane.b32.xlu0 %v446, 113
    %v1015 = vpop.permute.xlu0 %1014
    %vm1016 = vcmp.lt.s32.totalorder %v480, 113
    %v1017 = vsel %vm1016, %v1001, %v1009
    %v1018 = vsel %vm1016, %v1003, %v1011
    %v1019 = vsel %vm1016, %v1005, %v1013
    %v1020 = vsel %vm1016, %v1007, %v1015
    %v1021 = vsel %vm1016, %v993, %v1001
    %v1022 = vsel %vm1016, %v995, %v1003
    %v1023 = vsel %vm1016, %v997, %v1005
    %v1024 = vsel %vm1016, %v999, %v1007
    %v1025 = vsel %vm1016, %v985, %v993
    %v1026 = vsel %vm1016, %v987, %v995
    %v1027 = vsel %vm1016, %v989, %v997
    %v1028 = vsel %vm1016, %v991, %v999
    %v1029 = vsel %vm1016, %v1009, %v985
    %v1030 = vsel %vm1016, %v1011, %v987
    %v1031 = vsel %vm1016, %v1013, %v989
    %v1032 = vsel %vm1016, %v1015, %v991
    %s1033 = scalar_lea.vmem %s1, 24
    %v1034 = vld [vmem:[%s1033] sm:$0xf]
    %v1036 = vlaneseq
    %v1037 = vshrl.u32 %v1036, 7
    %v1038 = vsub.s32 0, %v1037
    %v1039 = vrot.slane %v1034, %v1038
    %v1040 = vlaneseq
    %v1041 = vshrl.u32 %v1040, 7
    %v1042 = vsub.s32 1, %v1041
    %v1043 = vrot.slane %v1034, %v1042
    %v1044 = vlaneseq
    %v1045 = vshrl.u32 %v1044, 7
    %v1046 = vsub.s32 2, %v1045
    %v1047 = vrot.slane %v1034, %v1046
    %v1048 = vlaneseq
    %v1049 = vshrl.u32 %v1048, 7
    %v1050 = vsub.s32 3, %v1049
    %v1051 = vrot.slane %v1034, %v1050
    %v1056 = vmul.f32 %v1025, %v1039
    %v1057 = vmul.f32 %v1021, %v1043
    %v1058 = vmul.f32 %v1017, %v1047
    %v1059 = vmul.f32 %v1029, %v1051
    %v1060 = vmul.f32 %v1026, %v1039
    %v1061 = vmul.f32 %v1022, %v1043
    %v1062 = vmul.f32 %v1018, %v1047
    %v1063 = vmul.f32 %v1030, %v1051
    %v1064 = vmul.f32 %v1027, %v1039
    %v1065 = vmul.f32 %v1023, %v1043
    %v1066 = vmul.f32 %v1019, %v1047
    %v1067 = vmul.f32 %v1031, %v1051
    %v1068 = vmul.f32 %v1028, %v1039
    %v1069 = vmul.f32 %v1024, %v1043
    %v1070 = vmul.f32 %v1020, %v1047
    %v1071 = vmul.f32 %v1032, %v1051
    %1072 = vst [vmem:[#allocation2 + $0x300] sm:$0xff] %v1056
    %1073 = vst [vmem:[#allocation2 + $0x308] sm:$0xff] %v1057
    %1074 = vst [vmem:[#allocation2 + $0x310] sm:$0xff] %v1058
    %1075 = vst [vmem:[#allocation2 + $0x318] sm:$0xff] %v1059
    %1076 = vst [vmem:[#allocation2 + $0x320] sm:$0xff] %v1060
    %1077 = vst [vmem:[#allocation2 + $0x328] sm:$0xff] %v1061
    %1078 = vst [vmem:[#allocation2 + $0x330] sm:$0xff] %v1062
    %1079 = vst [vmem:[#allocation2 + $0x338] sm:$0xff] %v1063
    %1080 = vst [vmem:[#allocation2 + $0x340] sm:$0xff] %v1064
    %1081 = vst [vmem:[#allocation2 + $0x348] sm:$0xff] %v1065
    %1082 = vst [vmem:[#allocation2 + $0x350] sm:$0xff] %v1066
    %1083 = vst [vmem:[#allocation2 + $0x358] sm:$0xff] %v1067
    %1084 = vst [vmem:[#allocation2 + $0x360] sm:$0xff] %v1068
    %1085 = vst [vmem:[#allocation2 + $0x368] sm:$0xff] %v1069
    %1086 = vst [vmem:[#allocation2 + $0x370] sm:$0xff] %v1070
    %1087 = vst [vmem:[#allocation2 + $0x378] sm:$0xff] %v1071
    %1088 = vrot.lane.b32.xlu0 %v431, 112
    %v1089 = vpop.permute.xlu0 %1088
    %1090 = vrot.lane.b32.xlu0 %v435, 112
    %v1091 = vpop.permute.xlu0 %1090
    %1092 = vrot.lane.b32.xlu0 %v439, 112
    %v1093 = vpop.permute.xlu0 %1092
    %1094 = vrot.lane.b32.xlu0 %v443, 112
    %v1095 = vpop.permute.xlu0 %1094
    %1096 = vrot.lane.b32.xlu0 %v432, 112
    %v1097 = vpop.permute.xlu0 %1096
    %1098 = vrot.lane.b32.xlu0 %v436, 112
    %v1099 = vpop.permute.xlu0 %1098
    %1100 = vrot.lane.b32.xlu0 %v440, 112
    %v1101 = vpop.permute.xlu0 %1100
    %1102 = vrot.lane.b32.xlu0 %v444, 112
    %v1103 = vpop.permute.xlu0 %1102
    %1104 = vrot.lane.b32.xlu0 %v433, 112
    %v1105 = vpop.permute.xlu0 %1104
    %1106 = vrot.lane.b32.xlu0 %v437, 112
    %v1107 = vpop.permute.xlu0 %1106
    %1108 = vrot.lane.b32.xlu0 %v441, 112
    %v1109 = vpop.permute.xlu0 %1108
    %1110 = vrot.lane.b32.xlu0 %v445, 112
    %v1111 = vpop.permute.xlu0 %1110
    %1112 = vrot.lane.b32.xlu0 %v434, 112
    %v1113 = vpop.permute.xlu0 %1112
    %1114 = vrot.lane.b32.xlu0 %v438, 112
    %v1115 = vpop.permute.xlu0 %1114
    %1116 = vrot.lane.b32.xlu0 %v442, 112
    %v1117 = vpop.permute.xlu0 %1116
    %1118 = vrot.lane.b32.xlu0 %v446, 112
    %v1119 = vpop.permute.xlu0 %1118
    %vm1120 = vcmp.lt.s32.totalorder %v480, 112
    %v1121 = vsel %vm1120, %v1105, %v1113
    %v1122 = vsel %vm1120, %v1107, %v1115
    %v1123 = vsel %vm1120, %v1109, %v1117
    %v1124 = vsel %vm1120, %v1111, %v1119
    %v1125 = vsel %vm1120, %v1097, %v1105
    %v1126 = vsel %vm1120, %v1099, %v1107
    %v1127 = vsel %vm1120, %v1101, %v1109
    %v1128 = vsel %vm1120, %v1103, %v1111
    %v1129 = vsel %vm1120, %v1089, %v1097
    %v1130 = vsel %vm1120, %v1091, %v1099
    %v1131 = vsel %vm1120, %v1093, %v1101
    %v1132 = vsel %vm1120, %v1095, %v1103
    %v1133 = vsel %vm1120, %v1113, %v1089
    %v1134 = vsel %vm1120, %v1115, %v1091
    %v1135 = vsel %vm1120, %v1117, %v1093
    %v1136 = vsel %vm1120, %v1119, %v1095
    %s1137 = scalar_lea.vmem %s1, 28
    %v1138 = vld [vmem:[%s1137] sm:$0xf]
    %v1140 = vlaneseq
    %v1141 = vshrl.u32 %v1140, 7
    %v1142 = vsub.s32 0, %v1141
    %v1143 = vrot.slane %v1138, %v1142
    %v1144 = vlaneseq
    %v1145 = vshrl.u32 %v1144, 7
    %v1146 = vsub.s32 1, %v1145
    %v1147 = vrot.slane %v1138, %v1146
    %v1148 = vlaneseq
    %v1149 = vshrl.u32 %v1148, 7
    %v1150 = vsub.s32 2, %v1149
    %v1151 = vrot.slane %v1138, %v1150
    %v1152 = vlaneseq
    %v1153 = vshrl.u32 %v1152, 7
    %v1154 = vsub.s32 3, %v1153
    %v1155 = vrot.slane %v1138, %v1154
    %v1160 = vmul.f32 %v1129, %v1143
    %v1161 = vmul.f32 %v1125, %v1147
    %v1162 = vmul.f32 %v1121, %v1151
    %v1163 = vmul.f32 %v1133, %v1155
    %v1164 = vmul.f32 %v1130, %v1143
    %v1165 = vmul.f32 %v1126, %v1147
    %v1166 = vmul.f32 %v1122, %v1151
    %v1167 = vmul.f32 %v1134, %v1155
    %v1168 = vmul.f32 %v1131, %v1143
    %v1169 = vmul.f32 %v1127, %v1147
    %v1170 = vmul.f32 %v1123, %v1151
    %v1171 = vmul.f32 %v1135, %v1155
    %v1172 = vmul.f32 %v1132, %v1143
    %v1173 = vmul.f32 %v1128, %v1147
    %v1174 = vmul.f32 %v1124, %v1151
    %v1175 = vmul.f32 %v1136, %v1155
    %1176 = vst [vmem:[#allocation2 + $0x380] sm:$0xff] %v1160
    %1177 = vst [vmem:[#allocation2 + $0x388] sm:$0xff] %v1161
    %1178 = vst [vmem:[#allocation2 + $0x390] sm:$0xff] %v1162
    %1179 = vst [vmem:[#allocation2 + $0x398] sm:$0xff] %v1163
    %1180 = vst [vmem:[#allocation2 + $0x3a0] sm:$0xff] %v1164
    %1181 = vst [vmem:[#allocation2 + $0x3a8] sm:$0xff] %v1165
    %1182 = vst [vmem:[#allocation2 + $0x3b0] sm:$0xff] %v1166
    %1183 = vst [vmem:[#allocation2 + $0x3b8] sm:$0xff] %v1167
    %1184 = vst [vmem:[#allocation2 + $0x3c0] sm:$0xff] %v1168
    %1185 = vst [vmem:[#allocation2 + $0x3c8] sm:$0xff] %v1169
    %1186 = vst [vmem:[#allocation2 + $0x3d0] sm:$0xff] %v1170
    %1187 = vst [vmem:[#allocation2 + $0x3d8] sm:$0xff] %v1171
    %1188 = vst [vmem:[#allocation2 + $0x3e0] sm:$0xff] %v1172
    %1189 = vst [vmem:[#allocation2 + $0x3e8] sm:$0xff] %v1173
    %1190 = vst [vmem:[#allocation2 + $0x3f0] sm:$0xff] %v1174
    %1191 = vst [vmem:[#allocation2 + $0x3f8] sm:$0xff] %v1175
    %1192 = vrot.lane.b32.xlu0 %v431, 111
    %v1193 = vpop.permute.xlu0 %1192
    %1194 = vrot.lane.b32.xlu0 %v435, 111
    %v1195 = vpop.permute.xlu0 %1194
    %1196 = vrot.lane.b32.xlu0 %v439, 111
    %v1197 = vpop.permute.xlu0 %1196
    %1198 = vrot.lane.b32.xlu0 %v443, 111
    %v1199 = vpop.permute.xlu0 %1198
    %1200 = vrot.lane.b32.xlu0 %v432, 111
    %v1201 = vpop.permute.xlu0 %1200
    %1202 = vrot.lane.b32.xlu0 %v436, 111
    %v1203 = vpop.permute.xlu0 %1202
    %1204 = vrot.lane.b32.xlu0 %v440, 111
    %v1205 = vpop.permute.xlu0 %1204
    %1206 = vrot.lane.b32.xlu0 %v444, 111
    %v1207 = vpop.permute.xlu0 %1206
    %1208 = vrot.lane.b32.xlu0 %v433, 111
    %v1209 = vpop.permute.xlu0 %1208
    %1210 = vrot.lane.b32.xlu0 %v437, 111
    %v1211 = vpop.permute.xlu0 %1210
    %1212 = vrot.lane.b32.xlu0 %v441, 111
    %v1213 = vpop.permute.xlu0 %1212
    %1214 = vrot.lane.b32.xlu0 %v445, 111
    %v1215 = vpop.permute.xlu0 %1214
    %1216 = vrot.lane.b32.xlu0 %v434, 111
    %v1217 = vpop.permute.xlu0 %1216
    %1218 = vrot.lane.b32.xlu0 %v438, 111
    %v1219 = vpop.permute.xlu0 %1218
    %1220 = vrot.lane.b32.xlu0 %v442, 111
    %v1221 = vpop.permute.xlu0 %1220
    %1222 = vrot.lane.b32.xlu0 %v446, 111
    %v1223 = vpop.permute.xlu0 %1222
    %vm1224 = vcmp.lt.s32.totalorder %v480, 111
    %v1225 = vsel %vm1224, %v1209, %v1217
    %v1226 = vsel %vm1224, %v1211, %v1219
    %v1227 = vsel %vm1224, %v1213, %v1221
    %v1228 = vsel %vm1224, %v1215, %v1223
    %v1229 = vsel %vm1224, %v1201, %v1209
    %v1230 = vsel %vm1224, %v1203, %v1211
    %v1231 = vsel %vm1224, %v1205, %v1213
    %v1232 = vsel %vm1224, %v1207, %v1215
    %v1233 = vsel %vm1224, %v1193, %v1201
    %v1234 = vsel %vm1224, %v1195, %v1203
    %v1235 = vsel %vm1224, %v1197, %v1205
    %v1236 = vsel %vm1224, %v1199, %v1207
    %v1237 = vsel %vm1224, %v1217, %v1193
    %v1238 = vsel %vm1224, %v1219, %v1195
    %v1239 = vsel %vm1224, %v1221, %v1197
    %v1240 = vsel %vm1224, %v1223, %v1199
    %s1241 = scalar_lea.vmem %s1, 32
    %v1242 = vld [vmem:[%s1241] sm:$0xf]
    %v1244 = vlaneseq
    %v1245 = vshrl.u32 %v1244, 7
    %v1246 = vsub.s32 0, %v1245
    %v1247 = vrot.slane %v1242, %v1246
    %v1248 = vlaneseq
    %v1249 = vshrl.u32 %v1248, 7
    %v1250 = vsub.s32 1, %v1249
    %v1251 = vrot.slane %v1242, %v1250
    %v1252 = vlaneseq
    %v1253 = vshrl.u32 %v1252, 7
    %v1254 = vsub.s32 2, %v1253
    %v1255 = vrot.slane %v1242, %v1254
    %v1256 = vlaneseq
    %v1257 = vshrl.u32 %v1256, 7
    %v1258 = vsub.s32 3, %v1257
    %v1259 = vrot.slane %v1242, %v1258
    %v1264 = vmul.f32 %v1233, %v1247
    %v1265 = vmul.f32 %v1229, %v1251
    %v1266 = vmul.f32 %v1225, %v1255
    %v1267 = vmul.f32 %v1237, %v1259
    %v1268 = vmul.f32 %v1234, %v1247
    %v1269 = vmul.f32 %v1230, %v1251
    %v1270 = vmul.f32 %v1226, %v1255
    %v1271 = vmul.f32 %v1238, %v1259
    %v1272 = vmul.f32 %v1235, %v1247
    %v1273 = vmul.f32 %v1231, %v1251
    %v1274 = vmul.f32 %v1227, %v1255
    %v1275 = vmul.f32 %v1239, %v1259
    %v1276 = vmul.f32 %v1236, %v1247
    %v1277 = vmul.f32 %v1232, %v1251
    %v1278 = vmul.f32 %v1228, %v1255
    %v1279 = vmul.f32 %v1240, %v1259
    %1280 = vst [vmem:[#allocation2 + $0x400] sm:$0xff] %v1264
    %1281 = vst [vmem:[#allocation2 + $0x408] sm:$0xff] %v1265
    %1282 = vst [vmem:[#allocation2 + $0x410] sm:$0xff] %v1266
    %1283 = vst [vmem:[#allocation2 + $0x418] sm:$0xff] %v1267
    %1284 = vst [vmem:[#allocation2 + $0x420] sm:$0xff] %v1268
    %1285 = vst [vmem:[#allocation2 + $0x428] sm:$0xff] %v1269
    %1286 = vst [vmem:[#allocation2 + $0x430] sm:$0xff] %v1270
    %1287 = vst [vmem:[#allocation2 + $0x438] sm:$0xff] %v1271
    %1288 = vst [vmem:[#allocation2 + $0x440] sm:$0xff] %v1272
    %1289 = vst [vmem:[#allocation2 + $0x448] sm:$0xff] %v1273
    %1290 = vst [vmem:[#allocation2 + $0x450] sm:$0xff] %v1274
    %1291 = vst [vmem:[#allocation2 + $0x458] sm:$0xff] %v1275
    %1292 = vst [vmem:[#allocation2 + $0x460] sm:$0xff] %v1276
    %1293 = vst [vmem:[#allocation2 + $0x468] sm:$0xff] %v1277
    %1294 = vst [vmem:[#allocation2 + $0x470] sm:$0xff] %v1278
    %1295 = vst [vmem:[#allocation2 + $0x478] sm:$0xff] %v1279
    %v1296 = vld [vmem:[%s6] sm:$0xff]
    %v1297 = vld [vmem:[%s6 + $0x8] sm:$0xff]
    %v1298 = vld [vmem:[%s6 + $0x10] sm:$0xff]
    %v1299 = vld [vmem:[#allocation2] sm:$0xff]
    %v1300 = vld [vmem:[#allocation2 + $0x8] sm:$0xff]
    %v1301 = vld [vmem:[#allocation2 + $0x10] sm:$0xff]
    %v1302 = vld [vmem:[#allocation2 + $0x18] sm:$0xff]
    %v1303 = vld [vmem:[#allocation2 + $0x20] sm:$0xff]
    %v1304 = vld [vmem:[#allocation2 + $0x28] sm:$0xff]
    %v1305 = vld [vmem:[#allocation2 + $0x30] sm:$0xff]
    %v1306 = vld [vmem:[#allocation2 + $0x38] sm:$0xff]
    %v1307 = vld [vmem:[#allocation2 + $0x40] sm:$0xff]
    %v1308 = vld [vmem:[#allocation2 + $0x48] sm:$0xff]
    %v1309 = vld [vmem:[#allocation2 + $0x50] sm:$0xff]
    %v1310 = vld [vmem:[#allocation2 + $0x58] sm:$0xff]
    %v1311 = vld [vmem:[#allocation2 + $0x60] sm:$0xff]
    %v1312 = vld [vmem:[#allocation2 + $0x68] sm:$0xff]
    %v1313 = vld [vmem:[#allocation2 + $0x70] sm:$0xff]
    %v1314 = vld [vmem:[#allocation2 + $0x78] sm:$0xff]
    %v1315 = vld [vmem:[#allocation2 + $0x80] sm:$0xff]
    %v1316 = vld [vmem:[#allocation2 + $0x88] sm:$0xff]
    %v1317 = vld [vmem:[#allocation2 + $0x90] sm:$0xff]
    %v1318 = vld [vmem:[#allocation2 + $0x98] sm:$0xff]
    %v1319 = vld [vmem:[#allocation2 + $0xa0] sm:$0xff]
    %v1320 = vld [vmem:[#allocation2 + $0xa8] sm:$0xff]
    %v1321 = vld [vmem:[#allocation2 + $0xb0] sm:$0xff]
    %v1322 = vld [vmem:[#allocation2 + $0xb8] sm:$0xff]
    %v1323 = vld [vmem:[#allocation2 + $0xc0] sm:$0xff]
    %v1324 = vld [vmem:[#allocation2 + $0xc8] sm:$0xff]
    %v1325 = vld [vmem:[#allocation2 + $0xd0] sm:$0xff]
    %v1326 = vld [vmem:[#allocation2 + $0xd8] sm:$0xff]
    %v1327 = vld [vmem:[#allocation2 + $0xe0] sm:$0xff]
    %v1328 = vld [vmem:[#allocation2 + $0xe8] sm:$0xff]
    %v1329 = vld [vmem:[#allocation2 + $0xf0] sm:$0xff]
    %v1330 = vld [vmem:[#allocation2 + $0xf8] sm:$0xff]
    %v1331 = vld [vmem:[#allocation2 + $0x100] sm:$0xff]
    %v1332 = vld [vmem:[#allocation2 + $0x108] sm:$0xff]
    %v1333 = vld [vmem:[#allocation2 + $0x110] sm:$0xff]
    %v1334 = vld [vmem:[#allocation2 + $0x118] sm:$0xff]
    %v1335 = vld [vmem:[#allocation2 + $0x120] sm:$0xff]
    %v1336 = vld [vmem:[#allocation2 + $0x128] sm:$0xff]
    %v1337 = vld [vmem:[#allocation2 + $0x130] sm:$0xff]
    %v1338 = vld [vmem:[#allocation2 + $0x138] sm:$0xff]
    %v1339 = vld [vmem:[#allocation2 + $0x140] sm:$0xff]
    %v1340 = vld [vmem:[#allocation2 + $0x148] sm:$0xff]
    %v1341 = vld [vmem:[#allocation2 + $0x150] sm:$0xff]
    %v1342 = vld [vmem:[#allocation2 + $0x158] sm:$0xff]
    %v1343 = vld [vmem:[#allocation2 + $0x160] sm:$0xff]
    %v1344 = vld [vmem:[#allocation2 + $0x168] sm:$0xff]
    %v1345 = vld [vmem:[#allocation2 + $0x170] sm:$0xff]
    %v1346 = vld [vmem:[#allocation2 + $0x178] sm:$0xff]
    %v1347 = vld [vmem:[#allocation2 + $0x180] sm:$0xff]
    %v1348 = vld [vmem:[#allocation2 + $0x188] sm:$0xff]
    %v1349 = vld [vmem:[#allocation2 + $0x190] sm:$0xff]
    %v1350 = vld [vmem:[#allocation2 + $0x198] sm:$0xff]
    %v1351 = vld [vmem:[#allocation2 + $0x1a0] sm:$0xff]
    %v1352 = vld [vmem:[#allocation2 + $0x1a8] sm:$0xff]
    %v1353 = vld [vmem:[#allocation2 + $0x1b0] sm:$0xff]
    %v1354 = vld [vmem:[#allocation2 + $0x1b8] sm:$0xff]
    %v1355 = vld [vmem:[#allocation2 + $0x1c0] sm:$0xff]
    %v1356 = vld [vmem:[#allocation2 + $0x1c8] sm:$0xff]
    %v1357 = vld [vmem:[#allocation2 + $0x1d0] sm:$0xff]
    %v1358 = vld [vmem:[#allocation2 + $0x1d8] sm:$0xff]
    %v1359 = vld [vmem:[#allocation2 + $0x1e0] sm:$0xff]
    %v1360 = vld [vmem:[#allocation2 + $0x1e8] sm:$0xff]
    %v1361 = vld [vmem:[#allocation2 + $0x1f0] sm:$0xff]
    %v1362 = vld [vmem:[#allocation2 + $0x1f8] sm:$0xff]
    %v1363 = vld [vmem:[#allocation2 + $0x200] sm:$0xff]
    %v1364 = vld [vmem:[#allocation2 + $0x208] sm:$0xff]
    %v1365 = vld [vmem:[#allocation2 + $0x210] sm:$0xff]
    %v1366 = vld [vmem:[#allocation2 + $0x218] sm:$0xff]
    %v1367 = vld [vmem:[#allocation2 + $0x220] sm:$0xff]
    %v1368 = vld [vmem:[#allocation2 + $0x228] sm:$0xff]
    %v1369 = vld [vmem:[#allocation2 + $0x230] sm:$0xff]
    %v1370 = vld [vmem:[#allocation2 + $0x238] sm:$0xff]
    %v1371 = vld [vmem:[#allocation2 + $0x240] sm:$0xff]
    %v1372 = vld [vmem:[#allocation2 + $0x248] sm:$0xff]
    %v1373 = vld [vmem:[#allocation2 + $0x250] sm:$0xff]
    %v1374 = vld [vmem:[#allocation2 + $0x258] sm:$0xff]
    %v1375 = vld [vmem:[#allocation2 + $0x260] sm:$0xff]
    %v1376 = vld [vmem:[#allocation2 + $0x268] sm:$0xff]
    %v1377 = vld [vmem:[#allocation2 + $0x270] sm:$0xff]
    %v1378 = vld [vmem:[#allocation2 + $0x278] sm:$0xff]
    %v1379 = vld [vmem:[#allocation2 + $0x280] sm:$0xff]
    %v1380 = vld [vmem:[#allocation2 + $0x288] sm:$0xff]
    %v1381 = vld [vmem:[#allocation2 + $0x290] sm:$0xff]
    %v1382 = vld [vmem:[#allocation2 + $0x298] sm:$0xff]
    %v1383 = vld [vmem:[#allocation2 + $0x2a0] sm:$0xff]
    %v1384 = vld [vmem:[#allocation2 + $0x2a8] sm:$0xff]
    %v1385 = vld [vmem:[#allocation2 + $0x2b0] sm:$0xff]
    %v1386 = vld [vmem:[#allocation2 + $0x2b8] sm:$0xff]
    %v1387 = vld [vmem:[#allocation2 + $0x2c0] sm:$0xff]
    %v1388 = vld [vmem:[#allocation2 + $0x2c8] sm:$0xff]
    %v1389 = vld [vmem:[#allocation2 + $0x2d0] sm:$0xff]
    %v1390 = vld [vmem:[#allocation2 + $0x2d8] sm:$0xff]
    %v1391 = vld [vmem:[#allocation2 + $0x2e0] sm:$0xff]
    %v1392 = vld [vmem:[#allocation2 + $0x2e8] sm:$0xff]
    %v1393 = vld [vmem:[#allocation2 + $0x2f0] sm:$0xff]
    %v1394 = vld [vmem:[#allocation2 + $0x2f8] sm:$0xff]
    %v1395 = vld [vmem:[#allocation2 + $0x300] sm:$0xff]
    %v1396 = vld [vmem:[#allocation2 + $0x308] sm:$0xff]
    %v1397 = vld [vmem:[#allocation2 + $0x310] sm:$0xff]
    %v1398 = vld [vmem:[#allocation2 + $0x318] sm:$0xff]
    %v1399 = vld [vmem:[#allocation2 + $0x320] sm:$0xff]
    %v1400 = vld [vmem:[#allocation2 + $0x328] sm:$0xff]
    %v1401 = vld [vmem:[#allocation2 + $0x330] sm:$0xff]
    %v1402 = vld [vmem:[#allocation2 + $0x338] sm:$0xff]
    %v1403 = vld [vmem:[#allocation2 + $0x340] sm:$0xff]
    %v1404 = vld [vmem:[#allocation2 + $0x348] sm:$0xff]
    %v1405 = vld [vmem:[#allocation2 + $0x350] sm:$0xff]
    %v1406 = vld [vmem:[#allocation2 + $0x358] sm:$0xff]
    %v1407 = vld [vmem:[#allocation2 + $0x360] sm:$0xff]
    %v1408 = vld [vmem:[#allocation2 + $0x368] sm:$0xff]
    %v1409 = vld [vmem:[#allocation2 + $0x370] sm:$0xff]
    %v1410 = vld [vmem:[#allocation2 + $0x378] sm:$0xff]
    %v1411 = vld [vmem:[#allocation2 + $0x380] sm:$0xff]
    %v1412 = vld [vmem:[#allocation2 + $0x388] sm:$0xff]
    %v1413 = vld [vmem:[#allocation2 + $0x390] sm:$0xff]
    %v1414 = vld [vmem:[#allocation2 + $0x398] sm:$0xff]
    %v1415 = vld [vmem:[#allocation2 + $0x3a0] sm:$0xff]
    %v1416 = vld [vmem:[#allocation2 + $0x3a8] sm:$0xff]
    %v1417 = vld [vmem:[#allocation2 + $0x3b0] sm:$0xff]
    %v1418 = vld [vmem:[#allocation2 + $0x3b8] sm:$0xff]
    %v1419 = vld [vmem:[#allocation2 + $0x3c0] sm:$0xff]
    %v1420 = vld [vmem:[#allocation2 + $0x3c8] sm:$0xff]
    %v1421 = vld [vmem:[#allocation2 + $0x3d0] sm:$0xff]
    %v1422 = vld [vmem:[#allocation2 + $0x3d8] sm:$0xff]
    %v1423 = vld [vmem:[#allocation2 + $0x3e0] sm:$0xff]
    %v1424 = vld [vmem:[#allocation2 + $0x3e8] sm:$0xff]
    %v1425 = vld [vmem:[#allocation2 + $0x3f0] sm:$0xff]
    %v1426 = vld [vmem:[#allocation2 + $0x3f8] sm:$0xff]
    %v1427 = vld [vmem:[#allocation2 + $0x400] sm:$0xff]
    %v1428 = vld [vmem:[#allocation2 + $0x408] sm:$0xff]
    %v1429 = vld [vmem:[#allocation2 + $0x410] sm:$0xff]
    %v1430 = vld [vmem:[#allocation2 + $0x418] sm:$0xff]
    %v1431 = vld [vmem:[#allocation2 + $0x420] sm:$0xff]
    %v1432 = vld [vmem:[#allocation2 + $0x428] sm:$0xff]
    %v1433 = vld [vmem:[#allocation2 + $0x430] sm:$0xff]
    %v1434 = vld [vmem:[#allocation2 + $0x438] sm:$0xff]
    %v1435 = vld [vmem:[#allocation2 + $0x440] sm:$0xff]
    %v1436 = vld [vmem:[#allocation2 + $0x448] sm:$0xff]
    %v1437 = vld [vmem:[#allocation2 + $0x450] sm:$0xff]
    %v1438 = vld [vmem:[#allocation2 + $0x458] sm:$0xff]
    %v1439 = vld [vmem:[#allocation2 + $0x460] sm:$0xff]
    %v1440 = vld [vmem:[#allocation2 + $0x468] sm:$0xff]
    %v1441 = vld [vmem:[#allocation2 + $0x470] sm:$0xff]
    %v1442 = vld [vmem:[#allocation2 + $0x478] sm:$0xff]
    %vm1443 = vcmask 261120
    %v1445 = vsel %vm1443, %v1298, 0
    %1447 = vmatprep.subr.mxu0 %v1360
    %1448 = vmatpush1.msra.mxu0 %v1359
    %1449 = vmatprep.subr.mxu0 %v1356
    %1450 = vmatpush1.msra.mxu0 %v1355
    %1451 = vmatprep.subr.mxu0 %v1352
    %1452 = vmatpush1.msra.mxu0 %v1351
    %1453 = vmatprep.subr.mxu0 %v1348
    %1454 = vmatpush1.msra.mxu0 %v1347
    %1455 = vmatprep.subr.mxu0 %v1344
    %1456 = vmatpush1.msra.mxu0 %v1343
    %1457 = vmatprep.subr.mxu0 %v1340
    %1458 = vmatpush1.msra.mxu0 %v1339
    %1459 = vmatprep.subr.mxu0 %v1336
    %1460 = vmatpush1.msra.mxu0 %v1335
    %1461 = vmatprep.subr.mxu0 %v1332
    %1462 = vmatpush1.msra.mxu0 %v1331
    %1463 = vmatprep.subr.mxu0 %v1328
    %1464 = vmatpush1.msra.mxu0 %v1327
    %1465 = vmatprep.subr.mxu0 %v1324
    %1466 = vmatpush1.msra.mxu0 %v1323
    %1467 = vmatprep.subr.mxu0 %v1320
    %1468 = vmatpush1.msra.mxu0 %v1319
    %1469 = vmatprep.subr.mxu0 %v1316
    %1470 = vmatpush1.msra.mxu0 %v1315
    %1471 = vmatprep.subr.mxu0 %v1312
    %1472 = vmatpush1.msra.mxu0 %v1311
    %1473 = vmatprep.subr.mxu0 %v1308
    %1474 = vmatpush1.msra.mxu0 %v1307
    %1475 = vmatprep.subr.mxu0 %v1304
    %1476 = vmatpush1.msra.mxu0 %v1303
    %1477 = vmatprep.subr.mxu0 %v1300
    %1478 = vmatpush1.msra.mxu0 %v1299
    %1479 = vmatprep.subr.mxu0 %v1424
    %1480 = vmatpush2.msra.mxu0 %v1423
    %1481 = vmatprep.subr.mxu0 %v1420
    %1482 = vmatpush2.msra.mxu0 %v1419
    %1483 = vmatprep.subr.mxu0 %v1416
    %1484 = vmatpush2.msra.mxu0 %v1415
    %1485 = vmatprep.subr.mxu0 %v1412
    %1486 = vmatpush2.msra.mxu0 %v1411
    %1487 = vmatprep.subr.mxu0 %v1408
    %1488 = vmatpush2.msra.mxu0 %v1407
    %1489 = vmatprep.subr.mxu0 %v1404
    %1490 = vmatpush2.msra.mxu0 %v1403
    %1491 = vmatprep.subr.mxu0 %v1400
    %1492 = vmatpush2.msra.mxu0 %v1399
    %1493 = vmatprep.subr.mxu0 %v1396
    %1494 = vmatpush2.msra.mxu0 %v1395
    %1495 = vmatprep.subr.mxu0 %v1392
    %1496 = vmatpush2.msra.mxu0 %v1391
    %1497 = vmatprep.subr.mxu0 %v1388
    %1498 = vmatpush2.msra.mxu0 %v1387
    %1499 = vmatprep.subr.mxu0 %v1384
    %1500 = vmatpush2.msra.mxu0 %v1383
    %1501 = vmatprep.subr.mxu0 %v1380
    %1502 = vmatpush2.msra.mxu0 %v1379
    %1503 = vmatprep.subr.mxu0 %v1376
    %1504 = vmatpush2.msra.mxu0 %v1375
    %1505 = vmatprep.subr.mxu0 %v1372
    %1506 = vmatpush2.msra.mxu0 %v1371
    %1507 = vmatprep.subr.mxu0 %v1368
    %1508 = vmatpush2.msra.mxu0 %v1367
    %1509 = vmatprep.subr.mxu0 %v1364
    %1510 = vmatpush2.msra.mxu0 %v1363
    %1511 = vmatprep.mubr.f32.mxu0 %v1297
    %1512 = vmatmul.mubr.f32.gmra.mxu0 %v1296
    %v1513 = vpop.f32.mrf.mxu0
    %v1514 = vadd.f32 0.0, %v1513
    %v1515 = vpop.f32.mrf.mxu0
    %v1516 = vadd.f32 0.0, %v1515
    %1517 = vdwg.mxu0
    %1518 = vmatprep.subr.mxu0 0.0
    %1519 = vmatpush1.msra.mxu0 0.0
    %1520 = vmatprep.subr.mxu0 0.0
    %1521 = vmatpush1.msra.mxu0 0.0
    %1522 = vmatprep.subr.mxu0 0.0
    %1523 = vmatpush1.msra.mxu0 0.0
    %1524 = vmatprep.subr.mxu0 0.0
    %1525 = vmatpush1.msra.mxu0 0.0
    %1526 = vmatprep.subr.mxu0 0.0
    %1527 = vmatpush1.msra.mxu0 0.0
    %1528 = vmatprep.subr.mxu0 0.0
    %1529 = vmatpush1.msra.mxu0 0.0
    %1530 = vmatprep.subr.mxu0 0.0
    %1531 = vmatpush1.msra.mxu0 0.0
    %1532 = vmatprep.subr.mxu0 0.0
    %1533 = vmatpush1.msra.mxu0 0.0
    %1534 = vmatprep.subr.mxu0 0.0
    %1535 = vmatpush1.msra.mxu0 0.0
    %1536 = vmatprep.subr.mxu0 0.0
    %1537 = vmatpush1.msra.mxu0 0.0
    %1538 = vmatprep.subr.mxu0 0.0
    %1539 = vmatpush1.msra.mxu0 0.0
    %1540 = vmatprep.subr.mxu0 0.0
    %1541 = vmatpush1.msra.mxu0 0.0
    %1542 = vmatprep.subr.mxu0 %v1440
    %1543 = vmatpush1.msra.mxu0 %v1439
    %1544 = vmatprep.subr.mxu0 %v1436
    %1545 = vmatpush1.msra.mxu0 %v1435
    %1546 = vmatprep.subr.mxu0 %v1432
    %1547 = vmatpush1.msra.mxu0 %v1431
    %1548 = vmatprep.subr.mxu0 %v1428
    %1549 = vmatpush1.msra.mxu0 %v1427
    %1550 = vmatprep.subr.mxu0 0.0
    %1551 = vmatpush2.msra.mxu0 0.0
    %1552 = vmatprep.subr.mxu0 0.0
    %1553 = vmatpush2.msra.mxu0 0.0
    %1554 = vmatprep.subr.mxu0 0.0
    %1555 = vmatpush2.msra.mxu0 0.0
    %1556 = vmatprep.subr.mxu0 0.0
    %1557 = vmatpush2.msra.mxu0 0.0
    %1558 = vmatprep.subr.mxu0 0.0
    %1559 = vmatpush2.msra.mxu0 0.0
    %1560 = vmatprep.subr.mxu0 0.0
    %1561 = vmatpush2.msra.mxu0 0.0
    %1562 = vmatprep.subr.mxu0 0.0
    %1563 = vmatpush2.msra.mxu0 0.0
    %1564 = vmatprep.subr.mxu0 0.0
    %1565 = vmatpush2.msra.mxu0 0.0
    %1566 = vmatprep.subr.mxu0 0.0
    %1567 = vmatpush2.msra.mxu0 0.0
    %1568 = vmatprep.subr.mxu0 0.0
    %1569 = vmatpush2.msra.mxu0 0.0
    %1570 = vmatprep.subr.mxu0 0.0
    %1571 = vmatpush2.msra.mxu0 0.0
    %1572 = vmatprep.subr.mxu0 0.0
    %1573 = vmatpush2.msra.mxu0 0.0
    %1574 = vmatprep.subr.mxu0 0.0
    %1575 = vmatpush2.msra.mxu0 0.0
    %1576 = vmatprep.subr.mxu0 0.0
    %1577 = vmatpush2.msra.mxu0 0.0
    %1578 = vmatprep.subr.mxu0 0.0
    %1579 = vmatpush2.msra.mxu0 0.0
    %1580 = vmatprep.subr.mxu0 0.0
    %1581 = vmatpush2.msra.mxu0 0.0
    %1582 = vmatprep.mubr.f32.mxu0 0.0
    %1583 = vmatmul.mubr.f32.gmra.mxu0 %v1445
    %v1584 = vpop.f32.mrf.mxu0
    %v1585 = vadd.f32 %v1514, %v1584
    %v1586 = vpop.f32.mrf.mxu0
    %v1587 = vadd.f32 %v1516, %v1586
    %1588 = vdwg.mxu0
    %1589 = vmatprep.subr.mxu0 %v1362
    %1590 = vmatpush1.msra.mxu0 %v1361
    %1591 = vmatprep.subr.mxu0 %v1358
    %1592 = vmatpush1.msra.mxu0 %v1357
    %1593 = vmatprep.subr.mxu0 %v1354
    %1594 = vmatpush1.msra.mxu0 %v1353
    %1595 = vmatprep.subr.mxu0 %v1350
    %1596 = vmatpush1.msra.mxu0 %v1349
    %1597 = vmatprep.subr.mxu0 %v1346
    %1598 = vmatpush1.msra.mxu0 %v1345
    %1599 = vmatprep.subr.mxu0 %v1342
    %1600 = vmatpush1.msra.mxu0 %v1341
    %1601 = vmatprep.subr.mxu0 %v1338
    %1602 = vmatpush1.msra.mxu0 %v1337
    %1603 = vmatprep.subr.mxu0 %v1334
    %1604 = vmatpush1.msra.mxu0 %v1333
    %1605 = vmatprep.subr.mxu0 %v1330
    %1606 = vmatpush1.msra.mxu0 %v1329
    %1607 = vmatprep.subr.mxu0 %v1326
    %1608 = vmatpush1.msra.mxu0 %v1325
    %1609 = vmatprep.subr.mxu0 %v1322
    %1610 = vmatpush1.msra.mxu0 %v1321
    %1611 = vmatprep.subr.mxu0 %v1318
    %1612 = vmatpush1.msra.mxu0 %v1317
    %1613 = vmatprep.subr.mxu0 %v1314
    %1614 = vmatpush1.msra.mxu0 %v1313
    %1615 = vmatprep.subr.mxu0 %v1310
    %1616 = vmatpush1.msra.mxu0 %v1309
    %1617 = vmatprep.subr.mxu0 %v1306
    %1618 = vmatpush1.msra.mxu0 %v1305
    %1619 = vmatprep.subr.mxu0 %v1302
    %1620 = vmatpush1.msra.mxu0 %v1301
    %1621 = vmatprep.subr.mxu0 %v1426
    %1622 = vmatpush2.msra.mxu0 %v1425
    %1623 = vmatprep.subr.mxu0 %v1422
    %1624 = vmatpush2.msra.mxu0 %v1421
    %1625 = vmatprep.subr.mxu0 %v1418
    %1626 = vmatpush2.msra.mxu0 %v1417
    %1627 = vmatprep.subr.mxu0 %v1414
    %1628 = vmatpush2.msra.mxu0 %v1413
    %1629 = vmatprep.subr.mxu0 %v1410
    %1630 = vmatpush2.msra.mxu0 %v1409
    %1631 = vmatprep.subr.mxu0 %v1406
    %1632 = vmatpush2.msra.mxu0 %v1405
    %1633 = vmatprep.subr.mxu0 %v1402
    %1634 = vmatpush2.msra.mxu0 %v1401
    %1635 = vmatprep.subr.mxu0 %v1398
    %1636 = vmatpush2.msra.mxu0 %v1397
    %1637 = vmatprep.subr.mxu0 %v1394
    %1638 = vmatpush2.msra.mxu0 %v1393
    %1639 = vmatprep.subr.mxu0 %v1390
    %1640 = vmatpush2.msra.mxu0 %v1389
    %1641 = vmatprep.subr.mxu0 %v1386
    %1642 = vmatpush2.msra.mxu0 %v1385
    %1643 = vmatprep.subr.mxu0 %v1382
    %1644 = vmatpush2.msra.mxu0 %v1381
    %1645 = vmatprep.subr.mxu0 %v1378
    %1646 = vmatpush2.msra.mxu0 %v1377
    %1647 = vmatprep.subr.mxu0 %v1374
    %1648 = vmatpush2.msra.mxu0 %v1373
    %1649 = vmatprep.subr.mxu0 %v1370
    %1650 = vmatpush2.msra.mxu0 %v1369
    %1651 = vmatprep.subr.mxu0 %v1366
    %1652 = vmatpush2.msra.mxu0 %v1365
    %1653 = vmatprep.mubr.f32.mxu0 %v1297
    %1654 = vmatmul.mubr.f32.gmra.mxu0 %v1296
    %v1655 = vpop.f32.mrf.mxu0
    %v1656 = vadd.f32 0.0, %v1655
    %v1657 = vpop.f32.mrf.mxu0
    %v1658 = vadd.f32 0.0, %v1657
    %1659 = vdwg.mxu0
    %1660 = vmatprep.subr.mxu0 0.0
    %1661 = vmatpush1.msra.mxu0 0.0
    %1662 = vmatprep.subr.mxu0 0.0
    %1663 = vmatpush1.msra.mxu0 0.0
    %1664 = vmatprep.subr.mxu0 0.0
    %1665 = vmatpush1.msra.mxu0 0.0
    %1666 = vmatprep.subr.mxu0 0.0
    %1667 = vmatpush1.msra.mxu0 0.0
    %1668 = vmatprep.subr.mxu0 0.0
    %1669 = vmatpush1.msra.mxu0 0.0
    %1670 = vmatprep.subr.mxu0 0.0
    %1671 = vmatpush1.msra.mxu0 0.0
    %1672 = vmatprep.subr.mxu0 0.0
    %1673 = vmatpush1.msra.mxu0 0.0
    %1674 = vmatprep.subr.mxu0 0.0
    %1675 = vmatpush1.msra.mxu0 0.0
    %1676 = vmatprep.subr.mxu0 0.0
    %1677 = vmatpush1.msra.mxu0 0.0
    %1678 = vmatprep.subr.mxu0 0.0
    %1679 = vmatpush1.msra.mxu0 0.0
    %1680 = vmatprep.subr.mxu0 0.0
    %1681 = vmatpush1.msra.mxu0 0.0
    %1682 = vmatprep.subr.mxu0 0.0
    %1683 = vmatpush1.msra.mxu0 0.0
    %1684 = vmatprep.subr.mxu0 %v1442
    %1685 = vmatpush1.msra.mxu0 %v1441
    %1686 = vmatprep.subr.mxu0 %v1438
    %1687 = vmatpush1.msra.mxu0 %v1437
    %1688 = vmatprep.subr.mxu0 %v1434
    %1689 = vmatpush1.msra.mxu0 %v1433
    %1690 = vmatprep.subr.mxu0 %v1430
    %1691 = vmatpush1.msra.mxu0 %v1429
    %1692 = vmatprep.subr.mxu0 0.0
    %1693 = vmatpush2.msra.mxu0 0.0
    %1694 = vmatprep.subr.mxu0 0.0
    %1695 = vmatpush2.msra.mxu0 0.0
    %1696 = vmatprep.subr.mxu0 0.0
    %1697 = vmatpush2.msra.mxu0 0.0
    %1698 = vmatprep.subr.mxu0 0.0
    %1699 = vmatpush2.msra.mxu0 0.0
    %1700 = vmatprep.subr.mxu0 0.0
    %1701 = vmatpush2.msra.mxu0 0.0
    %1702 = vmatprep.subr.mxu0 0.0
    %1703 = vmatpush2.msra.mxu0 0.0
    %1704 = vmatprep.subr.mxu0 0.0
    %1705 = vmatpush2.msra.mxu0 0.0
    %1706 = vmatprep.subr.mxu0 0.0
    %1707 = vmatpush2.msra.mxu0 0.0
    %1708 = vmatprep.subr.mxu0 0.0
    %1709 = vmatpush2.msra.mxu0 0.0
    %1710 = vmatprep.subr.mxu0 0.0
    %1711 = vmatpush2.msra.mxu0 0.0
    %1712 = vmatprep.subr.mxu0 0.0
    %1713 = vmatpush2.msra.mxu0 0.0
    %1714 = vmatprep.subr.mxu0 0.0
    %1715 = vmatpush2.msra.mxu0 0.0
    %1716 = vmatprep.subr.mxu0 0.0
    %1717 = vmatpush2.msra.mxu0 0.0
    %1718 = vmatprep.subr.mxu0 0.0
    %1719 = vmatpush2.msra.mxu0 0.0
    %1720 = vmatprep.subr.mxu0 0.0
    %1721 = vmatpush2.msra.mxu0 0.0
    %1722 = vmatprep.subr.mxu0 0.0
    %1723 = vmatpush2.msra.mxu0 0.0
    %1724 = vmatprep.mubr.f32.mxu0 0.0
    %1725 = vmatmul.mubr.f32.gmra.mxu0 %v1445
    %v1726 = vpop.f32.mrf.mxu0
    %v1727 = vadd.f32 %v1656, %v1726
    %v1728 = vpop.f32.mrf.mxu0
    %v1729 = vadd.f32 %v1658, %v1728
    %1730 = vdwg.mxu0
    %1731 = vst [vmem:[#allocation3] sm:$0xff] %v1585
    %1732 = vst [vmem:[#allocation3 + $0x8] sm:$0xff] %v1587
    %1733 = vst [vmem:[#allocation3 + $0x10] sm:$0xff] %v1727
    %1734 = vst [vmem:[#allocation3 + $0x18] sm:$0xff] %v1729
    // Predicated region
    $region30: #{tpu_custom_call.1} parent=1 // pred_check
      _
    $region31: #{tpu_custom_call.1} parent=1 // pred_check_branch
      %1736 = sbr.rel (0) target = $region33
    $region32: #{tpu_custom_call.1} parent=1 // pred_region
      %s1738 = ssub.s32 512, 512
      %1739 = vsyncadd [#allocation4], %s1738
      %s1741 = sshll.u32 [#allocation3], 4
      %s1742 = int_to_ptr.vmem [resolvable:$true] %s1741
      %1744 = dma.vmem_to_hbm [thread:$0]  %s1742, 512, %s7, [#allocation4]
    $region33: #{tpu_custom_call.1} parent=1 // pred_fallthru
      _
    // Predicated region
    $region34: #{tpu_custom_call.1} parent=1 // pred_check
      _
    $region35: #{tpu_custom_call.1} parent=1 // pred_check_branch
      %1746 = sbr.rel (0) target = $region37
    $region36: #{tpu_custom_call.1} parent=1 // pred_region
      %1747 = dma.done [#allocation4], 512
    $region37: #{tpu_custom_call.1} parent=1 // pred_fallthru
      _
    %1748 = vsyncpa [#allocation4], 1

</llo_original>
